<compile_context>
chip_gen: v6e
topology: v6e:2x2x1
jax: 0.10.0
libtpu: 0.0.40
codegen_flags: <defaults>
</compile_context>

<pallas_src>
import math
import functools

import jax
import jax.numpy as jnp
from jax.experimental import pallas as pl
from jax.experimental.pallas import tpu as pltpu

EPS_ATTN = 1e-8   # epsilon added to sigmoid attention (SlotSetEncoder)
EPS_LN = 1e-5     # torch.nn.LayerNorm default eps


# --------------------------------------------------------------------------
# One MBC SlotSetEncoder applied to a (BB, n, d_in) chunk -> (BB, K, dh) f32.
# --------------------------------------------------------------------------
def _sse_layer(h3, wrefs, fused):
    """wrefs = (QT, Wkv) if fused else (QT, Wk, Wv).

    QT  : (dh, K) = (S @ Wq).T / sqrt(dh), stored in the matmul dtype.
    Wkv : (d_in, 2*dh) = concat([Wk, Wv], axis=1) (only when dh % 128 == 0).
    Returns the exact MBC partial sum W @ V for this chunk, float32.
    """
    BB, n, d_in = h3.shape
    qt = wrefs[0][...]                      # (dh, K), scale pre-folded
    cd = qt.dtype                           # MXU operand dtype (bf16 or f32)
    dh, K = qt.shape

    # One tall matmul over the folded (batch*set) rows: full MXU row occupancy.
    hf = h3.reshape(BB * n, d_in).astype(cd)
    if fused:
        KV = jnp.dot(hf, wrefs[1][...], preferred_element_type=jnp.float32)
        Kx, V = KV[:, :dh], KV[:, dh:]      # dh % 128 == 0 -> tile-aligned split
    else:
        Kx = jnp.dot(hf, wrefs[1][...], preferred_element_type=jnp.float32)
        V = jnp.dot(hf, wrefs[2][...], preferred_element_type=jnp.float32)

    # Logits as one flat matmul against the (dh, K) slot matrix (no Q broadcast,
    # no per-batch tiny matmuls).  Layout (rows, K): slot axis last.
    M = jnp.dot(Kx.astype(cd), qt, preferred_element_type=jnp.float32)
    A = jax.nn.sigmoid(M) + EPS_ATTN        # f32 elementwise

    # MBC slot normalization: per (b, n) column, over the K slots (last axis).
    A3 = A.reshape(BB, n, K)
    inv = pl.reciprocal(jnp.sum(A3, axis=-1, keepdims=True), approx=False)
    W3 = A3 * inv                           # (BB, n, K) f32

    # Readout: contract the set axis n per batch element -> (BB, K, dh) f32.
    V3 = V.reshape(BB, n, dh)
    return jax.lax.dot_general(
        W3.astype(cd), V3.astype(cd),
        dimension_numbers=(((1,), (1,)), ((0,), (0,))),
        preferred_element_type=jnp.float32)


# --------------------------------------------------------------------------
# Fused kernel: all SlotSetEncoder layers + slot aggregation + LayerNorm.
# Grid = (batch_blocks, n_chunks); n_chunks is the MBC reduction axis.
# --------------------------------------------------------------------------
def _fused_kernel(x_ref, *refs, num_layers, fused, g, apply_ln, n_chunks):
    """refs = [per-layer weight refs..., gamma, beta, o_ref, h0_acc(scratch)]."""
    layer_refs, idx = [], 0
    for li in range(num_layers):
        cnt = 2 if fused[li] else 3
        layer_refs.append(refs[idx: idx + cnt])
        idx += cnt
    gamma_ref = refs[idx]
    beta_ref = refs[idx + 1]
    o_ref = refs[idx + 2]
    h0_acc = refs[idx + 3]                  # VMEM scratch (BB, K0, dh0) f32

    n = pl.program_id(1)

    @pl.when(n == 0)
    def _():
        h0_acc[...] = jnp.zeros_like(h0_acc)

    # Layer 0 on this N-chunk.  Slot normalization is per-(b, n) column, so
    # accumulating W @ V over chunks is exactly the unchunked MBC result.
    h0_acc[...] += _sse_layer(x_ref[...], layer_refs[0], fused[0])

    # Remaining layers + aggregation + LayerNorm only on the last chunk
    # (g aggregates slots of the LAST layer, never chunked -> exact for
    #  sum/mean/max/min).
    @pl.when(n == n_chunks - 1)
    def _():
        h = h0_acc[...]
        for li in range(1, num_layers):
            h = _sse_layer(h, layer_refs[li], fused[li])

        if g == "sum":
            s = jnp.sum(h, axis=1)
        elif g == "mean":
            s = jnp.mean(h, axis=1)
        elif g == "max":
            s = jnp.max(h, axis=1)
        elif g == "min":
            s = jnp.min(h, axis=1)
        else:
            raise NotImplementedError(g)

        if apply_ln:
            mu = jnp.mean(s, axis=-1, keepdims=True)
            var = jnp.mean((s - mu) ** 2, axis=-1, keepdims=True)  # biased (torch)
            s = (s - mu) * jax.lax.rsqrt(var + EPS_LN)
            s = s * gamma_ref[...] + beta_ref[...]

        o_ref[...] = s.astype(o_ref.dtype)


# --------------------------------------------------------------------------
# Generation-aware VMEM / tile selection.
# --------------------------------------------------------------------------
def _round_up(x, m):
    return ((x + m - 1) // m) * m


def _divisor_le(n, cap, mult=1):
    """Largest divisor of n that is <= cap and a multiple of `mult`, or None."""
    cap = min(cap, n)
    for c in range(cap, 0, -1):
        if n % c == 0 and c % mult == 0:
            return c
    return None


def _vmem_limit_bytes():
    """Request most of physical VMEM explicitly (v5e/v6e: 128 MiB -> ~96 MiB;
    v7x: 64 MiB per TensorCore -> ~48 MiB)."""
    try:
        cap = getattr(pltpu.get_tpu_info(), "vmem_capacity_bytes", None)
    except Exception:
        cap = None
    if not cap:
        cap = 64 << 20                       # conservative (v7x per-TC)
    return int(min(int(cap * 0.75), 112 << 20))


def _choose_bb(B):
    """Output block is (BB, dh_last): BB must be a multiple of 8 or the full B.
    Prefer >= 2 batch ('parallel') grid steps when B allows it, so v7x's two
    TensorCores both get work."""
    if B >= 16 and B % 8 == 0:
        bb = _divisor_le(B, min(128, B // 2), mult=8)
        if bb:
            return bb
    return _divisor_le(B, 128, mult=8) or B


def _choose_tiles(B, N, d0, x_itemsize, vmem_limit):
    BB = _choose_bb(B)
    # Real tiled footprint of the x block: lane dim pads to a multiple of 128.
    padded_d0 = _round_up(max(d0, 1), 128)
    # x double-buffer budget; rest of the limit is left for (single-buffered)
    # weights, the f32 accumulator scratch and the output block.
    x_budget = min(max(vmem_limit // 3, 4 << 20), 32 << 20)
    max_tn = max(8, x_budget // (2 * BB * padded_d0 * x_itemsize))
    # TN must be a multiple of 8 (second-to-last block dim) or the full N;
    # prefer multiples of 128 so the folded-row matmuls stay lane/row dense.
    TN = (_divisor_le(N, int(max_tn), mult=128)
          or _divisor_le(N, int(max_tn), mult=8))
    if TN is None:
        TN = N                               # no legal proper tile of N
        need = 2 * BB * _round_up(TN, 8) * padded_d0 * x_itemsize
        if need > vmem_limit:
            raise ValueError(
                f"Cannot tile N={N}: no multiple-of-8 divisor <= {int(max_tn)}, "
                f"and the full-N x block (~{need >> 20} MiB double-buffered) "
                f"exceeds the VMEM limit ({vmem_limit >> 20} MiB).")
    return BB, TN


# --------------------------------------------------------------------------
# ConsistentAggregator forward: single fused pallas_call.
# --------------------------------------------------------------------------
def consistent_aggregator_forward(x, enc_params, gamma, beta, *, g="sum", ln=True,
                                  matmul_dtype=jnp.bfloat16):
    """x: (B, N, d0) -> (B, d_hat[-1]).

    matmul_dtype controls the MXU operand dtype (bfloat16 by default per the
    perf review; accumulation and all elementwise math stay float32).  x may
    also be passed as bfloat16 to halve the HBM stream; it is cast to the
    matmul dtype inside the kernel either way.
    """
    B, N, d0 = x.shape
    L = len(enc_params)

    # Batch-invariant slot projection hoisted out of the kernel: Q^T with the
    # 1/sqrt(d_hat) scale folded in.  Wk|Wv fused into one (d, 2*dh) matrix
    # when the split is tile aligned (dh % 128 == 0).
    layer_weights, fused_flags, dims = [], [], []
    for (S, Wq, Wk, Wv) in enc_params:
        dh = Wq.shape[1]
        QT = ((S @ Wq) * (1.0 / math.sqrt(dh))).T.astype(matmul_dtype)   # (dh, K)
        if dh % 128 == 0:
            layer_weights.append(
                (QT, jnp.concatenate([Wk, Wv], axis=1).astype(matmul_dtype)))
            fused_flags.append(True)
        else:
            layer_weights.append((QT, Wk.astype(matmul_dtype), Wv.astype(matmul_dtype)))
            fused_flags.append(False)
        dims.append((S.shape[0], dh))
    K0, dh0 = dims[0]
    dh_last = dims[-1][1]
    fused_flags = tuple(fused_flags)

    vmem_limit = _vmem_limit_bytes()
    BB, TN = _choose_tiles(B, N, d0, x.dtype.itemsize, vmem_limit)
    n_chunks = N // TN
    grid = (B // BB, n_chunks)

    kernel = functools.partial(_fused_kernel, num_layers=L, fused=fused_flags,
                               g=g, apply_ln=ln, n_chunks=n_chunks)

    # Advisory cost estimate so XLA can schedule surrounding ops (the hoisted
    # S @ Wq, casts, ...) around the custom call.
    flops, trans, rows, d_in = 0, 0, B * N, d0
    for (Kl, dh) in dims:
        flops += 2 * rows * d_in * (2 * dh)      # K/V projections
        flops += 2 * rows * dh * Kl              # logits
        flops += 2 * rows * Kl * dh              # readout (contract set axis)
        trans += rows * Kl                       # sigmoid
        rows, d_in = B * Kl, dh
    bytes_accessed = int(x.size) * x.dtype.itemsize
    for lw in layer_weights:
        for w in lw:
            bytes_accessed += int(w.size) * w.dtype.itemsize
    bytes_accessed += int(gamma.size + beta.size + B * dh_last) * 4
    cost = pl.CostEstimate(flops=int(flops), transcendentals=int(trans),
                           bytes_accessed=int(bytes_accessed))

    def _build_and_call(single_buffer_weights):
        def _wspec(shape):
            if single_buffer_weights:
                # Block index never changes: no need to double-buffer; halves
                # the resident weight footprint (matters on v7x's 64 MiB/TC).
                return pl.BlockSpec(shape, lambda b, n: (0, 0),
                                    pipeline_mode=pl.Buffered(1))
            return pl.BlockSpec(shape, lambda b, n: (0, 0))

        in_specs = [pl.BlockSpec((BB, TN, d0), lambda b, n: (b, n, 0))]
        flat_inputs = [x]
        for lw in layer_weights:
            for w in lw:
                in_specs.append(_wspec(w.shape))
                flat_inputs.append(w)
        in_specs += [_wspec((1, dh_last)), _wspec((1, dh_last))]
        flat_inputs += [gamma, beta]

        return pl.pallas_call(
            kernel,
            out_shape=jax.ShapeDtypeStruct((B, dh_last), jnp.float32),
            grid=grid,
            in_specs=in_specs,
            out_specs=pl.BlockSpec((BB, dh_last), lambda b, n: (b, 0)),
            scratch_shapes=[pltpu.VMEM((BB, K0, dh0), jnp.float32)],
            compiler_params=pltpu.CompilerParams(
                dimension_semantics=("parallel", "arbitrary"),
                vmem_limit_bytes=vmem_limit),
            cost_estimate=cost,
        )(*flat_inputs)

    try:
        return _build_and_call(True)
    except Exception:
        # TODO(synk): pl.Buffered(1) single-buffering unsupported here; fall
        # back to the default double-buffered weight specs.
        return _build_and_call(False)


# --------------------------------------------------------------------------
# Pure-JAX reference (for correctness check only).
# --------------------------------------------------------------------------
def _reference(x, enc_params, gamma, beta, *, g="sum", ln=True):
    h = x
    for (S, Wq, Wk, Wv) in enc_params:
        d_hat = Wq.shape[1]
        Q = S @ Wq                                     # (K, d_hat)
        Kx = jnp.einsum("bnd,de->bne", h, Wk)
        V = jnp.einsum("bnd,de->bne", h, Wv)
        M = jnp.einsum("ke,bne->bkn", Q, Kx) / math.sqrt(d_hat)
        A = jax.nn.sigmoid(M) + EPS_ATTN
        W = A / jnp.sum(A, axis=1, keepdims=True)
        h = jnp.einsum("bkn,bne->bke", W, V)
    if g == "sum":
        s = jnp.sum(h, axis=1)
    elif g == "mean":
        s = jnp.mean(h, axis=1)
    elif g == "max":
        s = jnp.max(h, axis=1)
    elif g == "min":
        s = jnp.min(h, axis=1)
    else:
        raise NotImplementedError(g)
    if ln:
        mu = jnp.mean(s, axis=-1, keepdims=True)
        var = jnp.mean((s - mu) ** 2, axis=-1, keepdims=True)
        s = (s - mu) / jnp.sqrt(var + EPS_LN) * gamma[0] + beta[0]
    return s


if __name__ == "__main__":
    key = jax.random.PRNGKey(0)

    # Small config consistent with the module:
    #   K=[8,4], h=[32,32], d=[16,32], d_hat=[32,32]  (d[i+1] == d_hat[i])
    B, N = 2, 16
    K = [8, 4]
    h = [32, 32]
    d = [16, 32]
    d_hat = [32, 32]
    g, ln = "sum", True

    keys = jax.random.split(key, 1 + 4 * len(K))
    x = jax.random.normal(keys[0], (B, N, d[0]), dtype=jnp.float32)

    enc_params = []
    kidx = 1
    for i in range(len(K)):
        S = 0.1 * jax.random.normal(keys[kidx + 0], (K[i], h[i]), dtype=jnp.float32)
        Wq = 0.1 * jax.random.normal(keys[kidx + 1], (h[i], d_hat[i]), dtype=jnp.float32)
        Wk = 0.1 * jax.random.normal(keys[kidx + 2], (d[i], d_hat[i]), dtype=jnp.float32)
        Wv = 0.1 * jax.random.normal(keys[kidx + 3], (d[i], d_hat[i]), dtype=jnp.float32)
        enc_params.append((S, Wq, Wk, Wv))
        kidx += 4

    gamma = jnp.ones((1, d_hat[-1]), dtype=jnp.float32)    # LayerNorm weight
    beta = jnp.zeros((1, d_hat[-1]), dtype=jnp.float32)    # LayerNorm bias

    ref = _reference(x, enc_params, gamma, beta, g=g, ln=ln)

    # Exact path: f32 MXU operands, tight check against the f32 reference.
    out_f32 = consistent_aggregator_forward(x, enc_params, gamma, beta, g=g, ln=ln,
                                            matmul_dtype=jnp.float32)
    out_f32 = jax.block_until_ready(out_f32)
    assert out_f32.shape == (B, d_hat[-1]), out_f32.shape
    assert jnp.allclose(out_f32, ref, atol=1e-4, rtol=1e-4), \
        float(jnp.max(jnp.abs(out_f32 - ref)))

    # Default fast path: bf16 MXU operands (f32 accumulation / elementwise math);
    # looser tolerance against the f32 reference.
    out_bf16 = consistent_aggregator_forward(x, enc_params, gamma, beta, g=g, ln=ln)
    out_bf16 = jax.block_until_ready(out_bf16)
    assert out_bf16.shape == (B, d_hat[-1]), out_bf16.shape
    assert jnp.allclose(out_bf16, ref, atol=5e-2, rtol=5e-2), \
        float(jnp.max(jnp.abs(out_bf16 - ref)))

    print("KERNEL_OK")
</pallas_src>

<mosaic_0001>
module attributes {stable_mosaic.version = 11 : i64} {
  func.func @_fused_kernel(%arg0: i32, %arg1: i32, %arg2: memref<2x16x16xf32, #tpu.memory_space<vmem>>, %arg3: memref<32x8xf32, #tpu.memory_space<vmem>>, %arg4: memref<16x32xf32, #tpu.memory_space<vmem>>, %arg5: memref<16x32xf32, #tpu.memory_space<vmem>>, %arg6: memref<32x4xf32, #tpu.memory_space<vmem>>, %arg7: memref<32x32xf32, #tpu.memory_space<vmem>>, %arg8: memref<32x32xf32, #tpu.memory_space<vmem>>, %arg9: memref<1x32xf32, #tpu.memory_space<vmem>>, %arg10: memref<1x32xf32, #tpu.memory_space<vmem>>, %arg11: memref<2x32xf32, #tpu.memory_space<vmem>>, %arg12: memref<2x8x32xf32, #tpu.memory_space<vmem>>) attributes {dimension_semantics = [#tpu.dimension_semantics<parallel>, #tpu.dimension_semantics<arbitrary>], iteration_bounds = array<i64: 1, 1>, scalar_prefetch = 0 : i64, scratch_operands = 1 : i64, tpu.core_type = #tpu.core_type<tc>, window_params = [{transform_indices = @transform_0, window_bounds = array<i64: 2, 16, 16>}, {pipeline_mode = #tpu.pipeline_mode<synchronous>, transform_indices = @transform_1, window_bounds = array<i64: 32, 8>}, {pipeline_mode = #tpu.pipeline_mode<synchronous>, transform_indices = @transform_2, window_bounds = array<i64: 16, 32>}, {pipeline_mode = #tpu.pipeline_mode<synchronous>, transform_indices = @transform_3, window_bounds = array<i64: 16, 32>}, {pipeline_mode = #tpu.pipeline_mode<synchronous>, transform_indices = @transform_4, window_bounds = array<i64: 32, 4>}, {pipeline_mode = #tpu.pipeline_mode<synchronous>, transform_indices = @transform_5, window_bounds = array<i64: 32, 32>}, {pipeline_mode = #tpu.pipeline_mode<synchronous>, transform_indices = @transform_6, window_bounds = array<i64: 32, 32>}, {pipeline_mode = #tpu.pipeline_mode<synchronous>, transform_indices = @transform_7, window_bounds = array<i64: 1, 32>}, {pipeline_mode = #tpu.pipeline_mode<synchronous>, transform_indices = @transform_8, window_bounds = array<i64: 1, 32>}, {transform_indices = @transform_9, window_bounds = array<i64: 2, 32>}]} {
    %c0_i32 = arith.constant 0 : i32
    %0 = arith.cmpi eq, %arg1, %c0_i32 : i32
    %1 = arith.extui %0 : i1 to i32
    %c0_i32_0 = arith.constant 0 : i32
    %2 = arith.cmpi ne, %1, %c0_i32_0 : i32
    scf.if %2 {
      %cst_23 = arith.constant 0.000000e+00 : f32
      %32 = vector.broadcast %cst_23 : f32 to vector<2x8x32xf32>
      %c0_24 = arith.constant 0 : index
      %c0_25 = arith.constant 0 : index
      %c0_26 = arith.constant 0 : index
      %33 = vector.load %arg12[%c0_24, %c0_25, %c0_26] : memref<2x8x32xf32, #tpu.memory_space<vmem>>, vector<2x8x32xf32>
      tpu.vector_store %arg12[%c0_24, %c0_25, %c0_26], %32 {strides = array<i32>} : memref<2x8x32xf32, #tpu.memory_space<vmem>>, vector<2x8x32xf32>,
    } else {
    }
    %c0 = arith.constant 0 : index
    %c0_1 = arith.constant 0 : index
    %c0_2 = arith.constant 0 : index
    %3 = vector.load %arg12[%c0, %c0_1, %c0_2] : memref<2x8x32xf32, #tpu.memory_space<vmem>>, vector<2x8x32xf32>
    %c0_3 = arith.constant 0 : index
    %c0_4 = arith.constant 0 : index
    %c0_5 = arith.constant 0 : index
    %4 = vector.load %arg2[%c0_3, %c0_4, %c0_5] : memref<2x16x16xf32, #tpu.memory_space<vmem>>, vector<2x16x16xf32>
    %c0_6 = arith.constant 0 : index
    %c0_7 = arith.constant 0 : index
    %5 = vector.load %arg3[%c0_6, %c0_7] : memref<32x8xf32, #tpu.memory_space<vmem>>, vector<32x8xf32>
    %6 = vector.shape_cast %4 : vector<2x16x16xf32> to vector<32x16xf32>
    %c0_8 = arith.constant 0 : index
    %c0_9 = arith.constant 0 : index
    %7 = vector.load %arg4[%c0_8, %c0_9] : memref<16x32xf32, #tpu.memory_space<vmem>>, vector<16x32xf32>
    %cst = arith.constant dense<0.000000e+00> : vector<32x32xf32>
    %8 = tpu.matmul %6, %7, %cst {dimension_numbers = #tpu.dot_dimension_numbers<[1], [0], [0], [1], [0, 0, 1, 1], [], []>} : vector<32x16xf32>, vector<16x32xf32>, vector<32x32xf32> -> vector<32x32xf32>
    %c0_10 = arith.constant 0 : index
    %c0_11 = arith.constant 0 : index
    %9 = vector.load %arg5[%c0_10, %c0_11] : memref<16x32xf32, #tpu.memory_space<vmem>>, vector<16x32xf32>
    %cst_12 = arith.constant dense<0.000000e+00> : vector<32x32xf32>
    %10 = tpu.matmul %6, %9, %cst_12 {dimension_numbers = #tpu.dot_dimension_numbers<[1], [0], [0], [1], [0, 0, 1, 1], [], []>} : vector<32x16xf32>, vector<16x32xf32>, vector<32x32xf32> -> vector<32x32xf32>
    %cst_13 = arith.constant dense<0.000000e+00> : vector<32x8xf32>
    %11 = tpu.matmul %8, %5, %cst_13 {dimension_numbers = #tpu.dot_dimension_numbers<[1], [0], [0], [1], [0, 0, 1, 1], [], []>} : vector<32x32xf32>, vector<32x8xf32>, vector<32x8xf32> -> vector<32x8xf32>
    %12 = arith.negf %11 : vector<32x8xf32>
    %13 = math.exp %12 : vector<32x8xf32>
    %cst_14 = arith.constant 1.000000e+00 : f32
    %14 = vector.broadcast %cst_14 : f32 to vector<32x8xf32>
    %15 = arith.addf %14, %13 : vector<32x8xf32>
    %16 = arith.divf %14, %15 : vector<32x8xf32>
    %cst_15 = arith.constant 9.99999993E-9 : f32
    %17 = vector.broadcast %cst_15 : f32 to vector<32x8xf32>
    %18 = arith.addf %16, %17 : vector<32x8xf32>
    %19 = vector.shape_cast %18 : vector<32x8xf32> to vector<2x16x8xf32>
    %cst_16 = arith.constant dense<0.000000e+00> : vector<2x16xf32>
    %20 = vector.multi_reduction <add>, %19, %cst_16 [2] : vector<2x16x8xf32> to vector<2x16xf32>
    %21 = vector.shape_cast %20 : vector<2x16xf32> to vector<2x16x1xf32>
    %22 = tpu.reciprocal %21 : vector<2x16x1xf32> -> vector<2x16x1xf32>
    %23 = vector.broadcast %22 : vector<2x16x1xf32> to vector<2x16x8xf32>
    %24 = arith.mulf %19, %23 : vector<2x16x8xf32>
    %25 = vector.shape_cast %10 : vector<32x32xf32> to vector<2x16x32xf32>
    %cst_17 = arith.constant dense<0.000000e+00> : vector<2x8x32xf32>
    %26 = tpu.matmul %24, %25, %cst_17 {dimension_numbers = #tpu.dot_dimension_numbers<[1], [1], [2], [2], [0, 0, 0, 2, 1, 2], [0], [0]>} : vector<2x16x8xf32>, vector<2x16x32xf32>, vector<2x8x32xf32> -> vector<2x8x32xf32>
    %27 = arith.addf %3, %26 : vector<2x8x32xf32>
    %c0_18 = arith.constant 0 : index
    %c0_19 = arith.constant 0 : index
    %c0_20 = arith.constant 0 : index
    %28 = vector.load %arg12[%c0_18, %c0_19, %c0_20] : memref<2x8x32xf32, #tpu.memory_space<vmem>>, vector<2x8x32xf32>
    tpu.vector_store %arg12[%c0_18, %c0_19, %c0_20], %27 {strides = array<i32>} : memref<2x8x32xf32, #tpu.memory_space<vmem>>, vector<2x8x32xf32>,
    %c0_i32_21 = arith.constant 0 : i32
    %29 = arith.cmpi eq, %arg1, %c0_i32_21 : i32
    %30 = arith.extui %29 : i1 to i32
    %c0_i32_22 = arith.constant 0 : i32
    %31 = arith.cmpi ne, %30, %c0_i32_22 : i32
    scf.if %31 {
      %c0_23 = arith.constant 0 : index
      %c0_24 = arith.constant 0 : index
      %c0_25 = arith.constant 0 : index
      %32 = vector.load %arg12[%c0_23, %c0_24, %c0_25] : memref<2x8x32xf32, #tpu.memory_space<vmem>>, vector<2x8x32xf32>
      %c0_26 = arith.constant 0 : index
      %c0_27 = arith.constant 0 : index
      %33 = vector.load %arg6[%c0_26, %c0_27] : memref<32x4xf32, #tpu.memory_space<vmem>>, vector<32x4xf32>
      %34 = vector.shape_cast %32 : vector<2x8x32xf32> to vector<16x32xf32>
      %c0_28 = arith.constant 0 : index
      %c0_29 = arith.constant 0 : index
      %35 = vector.load %arg7[%c0_28, %c0_29] : memref<32x32xf32, #tpu.memory_space<vmem>>, vector<32x32xf32>
      %cst_30 = arith.constant dense<0.000000e+00> : vector<16x32xf32>
      %36 = tpu.matmul %34, %35, %cst_30 {dimension_numbers = #tpu.dot_dimension_numbers<[1], [0], [0], [1], [0, 0, 1, 1], [], []>} : vector<16x32xf32>, vector<32x32xf32>, vector<16x32xf32> -> vector<16x32xf32>
      %c0_31 = arith.constant 0 : index
      %c0_32 = arith.constant 0 : index
      %37 = vector.load %arg8[%c0_31, %c0_32] : memref<32x32xf32, #tpu.memory_space<vmem>>, vector<32x32xf32>
      %cst_33 = arith.constant dense<0.000000e+00> : vector<16x32xf32>
      %38 = tpu.matmul %34, %37, %cst_33 {dimension_numbers = #tpu.dot_dimension_numbers<[1], [0], [0], [1], [0, 0, 1, 1], [], []>} : vector<16x32xf32>, vector<32x32xf32>, vector<16x32xf32> -> vector<16x32xf32>
      %cst_34 = arith.constant dense<0.000000e+00> : vector<16x4xf32>
      %39 = tpu.matmul %36, %33, %cst_34 {dimension_numbers = #tpu.dot_dimension_numbers<[1], [0], [0], [1], [0, 0, 1, 1], [], []>} : vector<16x32xf32>, vector<32x4xf32>, vector<16x4xf32> -> vector<16x4xf32>
      %40 = arith.negf %39 : vector<16x4xf32>
      %41 = math.exp %40 : vector<16x4xf32>
      %cst_35 = arith.constant 1.000000e+00 : f32
      %42 = vector.broadcast %cst_35 : f32 to vector<16x4xf32>
      %43 = arith.addf %42, %41 : vector<16x4xf32>
      %44 = arith.divf %42, %43 : vector<16x4xf32>
      %cst_36 = arith.constant 9.99999993E-9 : f32
      %45 = vector.broadcast %cst_36 : f32 to vector<16x4xf32>
      %46 = arith.addf %44, %45 : vector<16x4xf32>
      %47 = vector.shape_cast %46 : vector<16x4xf32> to vector<2x8x4xf32>
      %cst_37 = arith.constant dense<0.000000e+00> : vector<2x8xf32>
      %48 = vector.multi_reduction <add>, %47, %cst_37 [2] : vector<2x8x4xf32> to vector<2x8xf32>
      %49 = vector.shape_cast %48 : vector<2x8xf32> to vector<2x8x1xf32>
      %50 = tpu.reciprocal %49 : vector<2x8x1xf32> -> vector<2x8x1xf32>
      %51 = vector.broadcast %50 : vector<2x8x1xf32> to vector<2x8x4xf32>
      %52 = arith.mulf %47, %51 : vector<2x8x4xf32>
      %53 = vector.shape_cast %38 : vector<16x32xf32> to vector<2x8x32xf32>
      %cst_38 = arith.constant dense<0.000000e+00> : vector<2x4x32xf32>
      %54 = tpu.matmul %52, %53, %cst_38 {dimension_numbers = #tpu.dot_dimension_numbers<[1], [1], [2], [2], [0, 0, 0, 2, 1, 2], [0], [0]>} : vector<2x8x4xf32>, vector<2x8x32xf32>, vector<2x4x32xf32> -> vector<2x4x32xf32>
      %cst_39 = arith.constant dense<0.000000e+00> : vector<2x32xf32>
      %55 = vector.multi_reduction <add>, %54, %cst_39 [1] : vector<2x4x32xf32> to vector<2x32xf32>
      %cst_40 = arith.constant dense<0.000000e+00> : vector<2xf32>
      %56 = vector.multi_reduction <add>, %55, %cst_40 [1] : vector<2x32xf32> to vector<2xf32>
      %57 = vector.shape_cast %56 : vector<2xf32> to vector<2x1xf32>
      %cst_41 = arith.constant 3.200000e+01 : f32
      %58 = vector.broadcast %cst_41 : f32 to vector<2x1xf32>
      %59 = arith.divf %57, %58 : vector<2x1xf32>
      %60 = vector.broadcast %59 : vector<2x1xf32> to vector<2x32xf32>
      %61 = arith.subf %55, %60 : vector<2x32xf32>
      %62 = arith.mulf %61, %61 : vector<2x32xf32>
      %cst_42 = arith.constant dense<0.000000e+00> : vector<2xf32>
      %63 = vector.multi_reduction <add>, %62, %cst_42 [1] : vector<2x32xf32> to vector<2xf32>
      %64 = vector.shape_cast %63 : vector<2xf32> to vector<2x1xf32>
      %cst_43 = arith.constant 3.200000e+01 : f32
      %65 = vector.broadcast %cst_43 : f32 to vector<2x1xf32>
      %66 = arith.divf %64, %65 : vector<2x1xf32>
      %67 = vector.broadcast %59 : vector<2x1xf32> to vector<2x32xf32>
      %68 = arith.subf %55, %67 : vector<2x32xf32>
      %cst_44 = arith.constant 9.99999974E-6 : f32
      %69 = vector.broadcast %cst_44 : f32 to vector<2x1xf32>
      %70 = arith.addf %66, %69 : vector<2x1xf32>
      %71 = math.rsqrt %70 : vector<2x1xf32>
      %72 = vector.broadcast %71 : vector<2x1xf32> to vector<2x32xf32>
      %73 = arith.mulf %68, %72 : vector<2x32xf32>
      %c0_45 = arith.constant 0 : index
      %c0_46 = arith.constant 0 : index
      %74 = vector.load %arg9[%c0_45, %c0_46] : memref<1x32xf32, #tpu.memory_space<vmem>>, vector<1x32xf32>
      %75 = vector.broadcast %74 : vector<1x32xf32> to vector<2x32xf32>
      %76 = arith.mulf %73, %75 : vector<2x32xf32>
      %c0_47 = arith.constant 0 : index
      %c0_48 = arith.constant 0 : index
      %77 = vector.load %arg10[%c0_47, %c0_48] : memref<1x32xf32, #tpu.memory_space<vmem>>, vector<1x32xf32>
      %78 = vector.broadcast %77 : vector<1x32xf32> to vector<2x32xf32>
      %79 = arith.addf %76, %78 : vector<2x32xf32>
      %c0_49 = arith.constant 0 : index
      %c0_50 = arith.constant 0 : index
      %80 = vector.load %arg11[%c0_49, %c0_50] : memref<2x32xf32, #tpu.memory_space<vmem>>, vector<2x32xf32>
      tpu.vector_store %arg11[%c0_49, %c0_50], %79 {strides = array<i32>} : memref<2x32xf32, #tpu.memory_space<vmem>>, vector<2x32xf32>,
    } else {
    }
    return
  }
  func.func @transform_0(%arg0: i32, %arg1: i32) -> (i32, i32, i32) {
    %c0_i32 = arith.constant 0 : i32
    %c0_i32_0 = arith.constant 0 : i32
    return %arg0, %arg1, %c0_i32 : i32, i32, i32
  }
  func.func @transform_1(%arg0: i32, %arg1: i32) -> (i32, i32) {
    %c0_i32 = arith.constant 0 : i32
    %c0_i32_0 = arith.constant 0 : i32
    %c0_i32_1 = arith.constant 0 : i32
    return %c0_i32, %c0_i32_0 : i32, i32
  }
  func.func @transform_2(%arg0: i32, %arg1: i32) -> (i32, i32) {
    %c0_i32 = arith.constant 0 : i32
    %c0_i32_0 = arith.constant 0 : i32
    %c0_i32_1 = arith.constant 0 : i32
    return %c0_i32, %c0_i32_0 : i32, i32
  }
  func.func @transform_3(%arg0: i32, %arg1: i32) -> (i32, i32) {
    %c0_i32 = arith.constant 0 : i32
    %c0_i32_0 = arith.constant 0 : i32
    %c0_i32_1 = arith.constant 0 : i32
    return %c0_i32, %c0_i32_0 : i32, i32
  }
  func.func @transform_4(%arg0: i32, %arg1: i32) -> (i32, i32) {
    %c0_i32 = arith.constant 0 : i32
    %c0_i32_0 = arith.constant 0 : i32
    %c0_i32_1 = arith.constant 0 : i32
    return %c0_i32, %c0_i32_0 : i32, i32
  }
  func.func @transform_5(%arg0: i32, %arg1: i32) -> (i32, i32) {
    %c0_i32 = arith.constant 0 : i32
    %c0_i32_0 = arith.constant 0 : i32
    %c0_i32_1 = arith.constant 0 : i32
    return %c0_i32, %c0_i32_0 : i32, i32
  }
  func.func @transform_6(%arg0: i32, %arg1: i32) -> (i32, i32) {
    %c0_i32 = arith.constant 0 : i32
    %c0_i32_0 = arith.constant 0 : i32
    %c0_i32_1 = arith.constant 0 : i32
    return %c0_i32, %c0_i32_0 : i32, i32
  }
  func.func @transform_7(%arg0: i32, %arg1: i32) -> (i32, i32) {
    %c0_i32 = arith.constant 0 : i32
    %c0_i32_0 = arith.constant 0 : i32
    %c0_i32_1 = arith.constant 0 : i32
    return %c0_i32, %c0_i32_0 : i32, i32
  }
  func.func @transform_8(%arg0: i32, %arg1: i32) -> (i32, i32) {
    %c0_i32 = arith.constant 0 : i32
    %c0_i32_0 = arith.constant 0 : i32
    %c0_i32_1 = arith.constant 0 : i32
    return %c0_i32, %c0_i32_0 : i32, i32
  }
  func.func @transform_9(%arg0: i32, %arg1: i32) -> (i32, i32) {
    %c0_i32 = arith.constant 0 : i32
    %c0_i32_0 = arith.constant 0 : i32
    return %arg0, %c0_i32 : i32, i32
  }
}

module attributes {stable_mosaic.version = 11 : i64} {
  func.func @_fused_kernel(%arg0: i32, %arg1: i32, %arg2: memref<2x16x16xf32, #tpu.memory_space<vmem>>, %arg3: memref<32x8xf32, #tpu.memory_space<vmem>>, %arg4: memref<16x32xf32, #tpu.memory_space<vmem>>, %arg5: memref<16x32xf32, #tpu.memory_space<vmem>>, %arg6: memref<32x4xf32, #tpu.memory_space<vmem>>, %arg7: memref<32x32xf32, #tpu.memory_space<vmem>>, %arg8: memref<32x32xf32, #tpu.memory_space<vmem>>, %arg9: memref<1x32xf32, #tpu.memory_space<vmem>>, %arg10: memref<1x32xf32, #tpu.memory_space<vmem>>, %arg11: memref<2x32xf32, #tpu.memory_space<vmem>>, %arg12: memref<2x8x32xf32, #tpu.memory_space<vmem>>) attributes {dimension_semantics = [#tpu.dimension_semantics<parallel>, #tpu.dimension_semantics<arbitrary>], iteration_bounds = array<i64: 1, 1>, scalar_prefetch = 0 : i64, scratch_operands = 1 : i64, tpu.core_type = #tpu.core_type<tc>, window_params = [{transform_indices = @transform_0, window_bounds = array<i64: 2, 16, 16>}, {pipeline_mode = #tpu.pipeline_mode<synchronous>, transform_indices = @transform_1, window_bounds = array<i64: 32, 8>}, {pipeline_mode = #tpu.pipeline_mode<synchronous>, transform_indices = @transform_2, window_bounds = array<i64: 16, 32>}, {pipeline_mode = #tpu.pipeline_mode<synchronous>, transform_indices = @transform_3, window_bounds = array<i64: 16, 32>}, {pipeline_mode = #tpu.pipeline_mode<synchronous>, transform_indices = @transform_4, window_bounds = array<i64: 32, 4>}, {pipeline_mode = #tpu.pipeline_mode<synchronous>, transform_indices = @transform_5, window_bounds = array<i64: 32, 32>}, {pipeline_mode = #tpu.pipeline_mode<synchronous>, transform_indices = @transform_6, window_bounds = array<i64: 32, 32>}, {pipeline_mode = #tpu.pipeline_mode<synchronous>, transform_indices = @transform_7, window_bounds = array<i64: 1, 32>}, {pipeline_mode = #tpu.pipeline_mode<synchronous>, transform_indices = @transform_8, window_bounds = array<i64: 1, 32>}, {transform_indices = @transform_9, window_bounds = array<i64: 2, 32>}]} {
    %c0_i32 = arith.constant 0 : i32
    %0 = arith.cmpi eq, %arg1, %c0_i32 : i32
    %1 = arith.extui %0 : i1 to i32
    %c0_i32_0 = arith.constant 0 : i32
    %2 = arith.cmpi ne, %1, %c0_i32_0 : i32
    scf.if %2 {
      %cst_23 = arith.constant 0.000000e+00 : f32
      %32 = vector.broadcast %cst_23 : f32 to vector<2x8x32xf32>
      %c0_24 = arith.constant 0 : index
      %c0_25 = arith.constant 0 : index
      %c0_26 = arith.constant 0 : index
      %33 = vector.load %arg12[%c0_24, %c0_25, %c0_26] : memref<2x8x32xf32, #tpu.memory_space<vmem>>, vector<2x8x32xf32>
      tpu.vector_store %arg12[%c0_24, %c0_25, %c0_26], %32 {strides = array<i32>} : memref<2x8x32xf32, #tpu.memory_space<vmem>>, vector<2x8x32xf32>,
    } else {
    }
    %c0 = arith.constant 0 : index
    %c0_1 = arith.constant 0 : index
    %c0_2 = arith.constant 0 : index
    %3 = vector.load %arg12[%c0, %c0_1, %c0_2] : memref<2x8x32xf32, #tpu.memory_space<vmem>>, vector<2x8x32xf32>
    %c0_3 = arith.constant 0 : index
    %c0_4 = arith.constant 0 : index
    %c0_5 = arith.constant 0 : index
    %4 = vector.load %arg2[%c0_3, %c0_4, %c0_5] : memref<2x16x16xf32, #tpu.memory_space<vmem>>, vector<2x16x16xf32>
    %c0_6 = arith.constant 0 : index
    %c0_7 = arith.constant 0 : index
    %5 = vector.load %arg3[%c0_6, %c0_7] : memref<32x8xf32, #tpu.memory_space<vmem>>, vector<32x8xf32>
    %6 = vector.shape_cast %4 : vector<2x16x16xf32> to vector<32x16xf32>
    %c0_8 = arith.constant 0 : index
    %c0_9 = arith.constant 0 : index
    %7 = vector.load %arg4[%c0_8, %c0_9] : memref<16x32xf32, #tpu.memory_space<vmem>>, vector<16x32xf32>
    %cst = arith.constant dense<0.000000e+00> : vector<32x32xf32>
    %8 = tpu.matmul %6, %7, %cst {dimension_numbers = #tpu.dot_dimension_numbers<[1], [0], [0], [1], [0, 0, 1, 1], [], []>} : vector<32x16xf32>, vector<16x32xf32>, vector<32x32xf32> -> vector<32x32xf32>
    %c0_10 = arith.constant 0 : index
    %c0_11 = arith.constant 0 : index
    %9 = vector.load %arg5[%c0_10, %c0_11] : memref<16x32xf32, #tpu.memory_space<vmem>>, vector<16x32xf32>
    %cst_12 = arith.constant dense<0.000000e+00> : vector<32x32xf32>
    %10 = tpu.matmul %6, %9, %cst_12 {dimension_numbers = #tpu.dot_dimension_numbers<[1], [0], [0], [1], [0, 0, 1, 1], [], []>} : vector<32x16xf32>, vector<16x32xf32>, vector<32x32xf32> -> vector<32x32xf32>
    %cst_13 = arith.constant dense<0.000000e+00> : vector<32x8xf32>
    %11 = tpu.matmul %8, %5, %cst_13 {dimension_numbers = #tpu.dot_dimension_numbers<[1], [0], [0], [1], [0, 0, 1, 1], [], []>} : vector<32x32xf32>, vector<32x8xf32>, vector<32x8xf32> -> vector<32x8xf32>
    %12 = arith.negf %11 : vector<32x8xf32>
    %13 = math.exp %12 : vector<32x8xf32>
    %cst_14 = arith.constant 1.000000e+00 : f32
    %14 = vector.broadcast %cst_14 : f32 to vector<32x8xf32>
    %15 = arith.addf %14, %13 : vector<32x8xf32>
    %16 = arith.divf %14, %15 : vector<32x8xf32>
    %cst_15 = arith.constant 9.99999993E-9 : f32
    %17 = vector.broadcast %cst_15 : f32 to vector<32x8xf32>
    %18 = arith.addf %16, %17 : vector<32x8xf32>
    %19 = vector.shape_cast %18 : vector<32x8xf32> to vector<2x16x8xf32>
    %cst_16 = arith.constant dense<0.000000e+00> : vector<2x16xf32>
    %20 = vector.multi_reduction <add>, %19, %cst_16 [2] : vector<2x16x8xf32> to vector<2x16xf32>
    %21 = vector.shape_cast %20 : vector<2x16xf32> to vector<2x16x1xf32>
    %22 = tpu.reciprocal %21 : vector<2x16x1xf32> -> vector<2x16x1xf32>
    %23 = vector.broadcast %22 : vector<2x16x1xf32> to vector<2x16x8xf32>
    %24 = arith.mulf %19, %23 : vector<2x16x8xf32>
    %25 = vector.shape_cast %10 : vector<32x32xf32> to vector<2x16x32xf32>
    %cst_17 = arith.constant dense<0.000000e+00> : vector<2x8x32xf32>
    %26 = tpu.matmul %24, %25, %cst_17 {dimension_numbers = #tpu.dot_dimension_numbers<[1], [1], [2], [2], [0, 0, 0, 2, 1, 2], [0], [0]>} : vector<2x16x8xf32>, vector<2x16x32xf32>, vector<2x8x32xf32> -> vector<2x8x32xf32>
    %27 = arith.addf %3, %26 : vector<2x8x32xf32>
    %c0_18 = arith.constant 0 : index
    %c0_19 = arith.constant 0 : index
    %c0_20 = arith.constant 0 : index
    %28 = vector.load %arg12[%c0_18, %c0_19, %c0_20] : memref<2x8x32xf32, #tpu.memory_space<vmem>>, vector<2x8x32xf32>
    tpu.vector_store %arg12[%c0_18, %c0_19, %c0_20], %27 {strides = array<i32>} : memref<2x8x32xf32, #tpu.memory_space<vmem>>, vector<2x8x32xf32>,
    %c0_i32_21 = arith.constant 0 : i32
    %29 = arith.cmpi eq, %arg1, %c0_i32_21 : i32
    %30 = arith.extui %29 : i1 to i32
    %c0_i32_22 = arith.constant 0 : i32
    %31 = arith.cmpi ne, %30, %c0_i32_22 : i32
    scf.if %31 {
      %c0_23 = arith.constant 0 : index
      %c0_24 = arith.constant 0 : index
      %c0_25 = arith.constant 0 : index
      %32 = vector.load %arg12[%c0_23, %c0_24, %c0_25] : memref<2x8x32xf32, #tpu.memory_space<vmem>>, vector<2x8x32xf32>
      %c0_26 = arith.constant 0 : index
      %c0_27 = arith.constant 0 : index
      %33 = vector.load %arg6[%c0_26, %c0_27] : memref<32x4xf32, #tpu.memory_space<vmem>>, vector<32x4xf32>
      %34 = vector.shape_cast %32 : vector<2x8x32xf32> to vector<16x32xf32>
      %c0_28 = arith.constant 0 : index
      %c0_29 = arith.constant 0 : index
      %35 = vector.load %arg7[%c0_28, %c0_29] : memref<32x32xf32, #tpu.memory_space<vmem>>, vector<32x32xf32>
      %cst_30 = arith.constant dense<0.000000e+00> : vector<16x32xf32>
      %36 = tpu.matmul %34, %35, %cst_30 {dimension_numbers = #tpu.dot_dimension_numbers<[1], [0], [0], [1], [0, 0, 1, 1], [], []>} : vector<16x32xf32>, vector<32x32xf32>, vector<16x32xf32> -> vector<16x32xf32>
      %c0_31 = arith.constant 0 : index
      %c0_32 = arith.constant 0 : index
      %37 = vector.load %arg8[%c0_31, %c0_32] : memref<32x32xf32, #tpu.memory_space<vmem>>, vector<32x32xf32>
      %cst_33 = arith.constant dense<0.000000e+00> : vector<16x32xf32>
      %38 = tpu.matmul %34, %37, %cst_33 {dimension_numbers = #tpu.dot_dimension_numbers<[1], [0], [0], [1], [0, 0, 1, 1], [], []>} : vector<16x32xf32>, vector<32x32xf32>, vector<16x32xf32> -> vector<16x32xf32>
      %cst_34 = arith.constant dense<0.000000e+00> : vector<16x4xf32>
      %39 = tpu.matmul %36, %33, %cst_34 {dimension_numbers = #tpu.dot_dimension_numbers<[1], [0], [0], [1], [0, 0, 1, 1], [], []>} : vector<16x32xf32>, vector<32x4xf32>, vector<16x4xf32> -> vector<16x4xf32>
      %40 = arith.negf %39 : vector<16x4xf32>
      %41 = math.exp %40 : vector<16x4xf32>
      %cst_35 = arith.constant 1.000000e+00 : f32
      %42 = vector.broadcast %cst_35 : f32 to vector<16x4xf32>
      %43 = arith.addf %42, %41 : vector<16x4xf32>
      %44 = arith.divf %42, %43 : vector<16x4xf32>
      %cst_36 = arith.constant 9.99999993E-9 : f32
      %45 = vector.broadcast %cst_36 : f32 to vector<16x4xf32>
      %46 = arith.addf %44, %45 : vector<16x4xf32>
      %47 = vector.shape_cast %46 : vector<16x4xf32> to vector<2x8x4xf32>
      %cst_37 = arith.constant dense<0.000000e+00> : vector<2x8xf32>
      %48 = vector.multi_reduction <add>, %47, %cst_37 [2] : vector<2x8x4xf32> to vector<2x8xf32>
      %49 = vector.shape_cast %48 : vector<2x8xf32> to vector<2x8x1xf32>
      %50 = tpu.reciprocal %49 : vector<2x8x1xf32> -> vector<2x8x1xf32>
      %51 = vector.broadcast %50 : vector<2x8x1xf32> to vector<2x8x4xf32>
      %52 = arith.mulf %47, %51 : vector<2x8x4xf32>
      %53 = vector.shape_cast %38 : vector<16x32xf32> to vector<2x8x32xf32>
      %cst_38 = arith.constant dense<0.000000e+00> : vector<2x4x32xf32>
      %54 = tpu.matmul %52, %53, %cst_38 {dimension_numbers = #tpu.dot_dimension_numbers<[1], [1], [2], [2], [0, 0, 0, 2, 1, 2], [0], [0]>} : vector<2x8x4xf32>, vector<2x8x32xf32>, vector<2x4x32xf32> -> vector<2x4x32xf32>
      %cst_39 = arith.constant dense<0.000000e+00> : vector<2x32xf32>
      %55 = vector.multi_reduction <add>, %54, %cst_39 [1] : vector<2x4x32xf32> to vector<2x32xf32>
      %cst_40 = arith.constant dense<0.000000e+00> : vector<2xf32>
      %56 = vector.multi_reduction <add>, %55, %cst_40 [1] : vector<2x32xf32> to vector<2xf32>
      %57 = vector.shape_cast %56 : vector<2xf32> to vector<2x1xf32>
      %cst_41 = arith.constant 3.200000e+01 : f32
      %58 = vector.broadcast %cst_41 : f32 to vector<2x1xf32>
      %59 = arith.divf %57, %58 : vector<2x1xf32>
      %60 = vector.broadcast %59 : vector<2x1xf32> to vector<2x32xf32>
      %61 = arith.subf %55, %60 : vector<2x32xf32>
      %62 = arith.mulf %61, %61 : vector<2x32xf32>
      %cst_42 = arith.constant dense<0.000000e+00> : vector<2xf32>
      %63 = vector.multi_reduction <add>, %62, %cst_42 [1] : vector<2x32xf32> to vector<2xf32>
      %64 = vector.shape_cast %63 : vector<2xf32> to vector<2x1xf32>
      %cst_43 = arith.constant 3.200000e+01 : f32
      %65 = vector.broadcast %cst_43 : f32 to vector<2x1xf32>
      %66 = arith.divf %64, %65 : vector<2x1xf32>
      %67 = vector.broadcast %59 : vector<2x1xf32> to vector<2x32xf32>
      %68 = arith.subf %55, %67 : vector<2x32xf32>
      %cst_44 = arith.constant 9.99999974E-6 : f32
      %69 = vector.broadcast %cst_44 : f32 to vector<2x1xf32>
      %70 = arith.addf %66, %69 : vector<2x1xf32>
      %71 = math.rsqrt %70 : vector<2x1xf32>
      %72 = vector.broadcast %71 : vector<2x1xf32> to vector<2x32xf32>
      %73 = arith.mulf %68, %72 : vector<2x32xf32>
      %c0_45 = arith.constant 0 : index
      %c0_46 = arith.constant 0 : index
      %74 = vector.load %arg9[%c0_45, %c0_46] : memref<1x32xf32, #tpu.memory_space<vmem>>, vector<1x32xf32>
      %75 = vector.broadcast %74 : vector<1x32xf32> to vector<2x32xf32>
      %76 = arith.mulf %73, %75 : vector<2x32xf32>
      %c0_47 = arith.constant 0 : index
      %c0_48 = arith.constant 0 : index
      %77 = vector.load %arg10[%c0_47, %c0_48] : memref<1x32xf32, #tpu.memory_space<vmem>>, vector<1x32xf32>
      %78 = vector.broadcast %77 : vector<1x32xf32> to vector<2x32xf32>
      %79 = arith.addf %76, %78 : vector<2x32xf32>
      %c0_49 = arith.constant 0 : index
      %c0_50 = arith.constant 0 : index
      %80 = vector.load %arg11[%c0_49, %c0_50] : memref<2x32xf32, #tpu.memory_space<vmem>>, vector<2x32xf32>
      tpu.vector_store %arg11[%c0_49, %c0_50], %79 {strides = array<i32>} : memref<2x32xf32, #tpu.memory_space<vmem>>, vector<2x32xf32>,
    } else {
    }
    return
  }
  func.func @transform_0(%arg0: i32, %arg1: i32) -> (i32, i32, i32) {
    %c0_i32 = arith.constant 0 : i32
    %c0_i32_0 = arith.constant 0 : i32
    return %arg0, %arg1, %c0_i32 : i32, i32, i32
  }
  func.func @transform_1(%arg0: i32, %arg1: i32) -> (i32, i32) {
    %c0_i32 = arith.constant 0 : i32
    %c0_i32_0 = arith.constant 0 : i32
    %c0_i32_1 = arith.constant 0 : i32
    return %c0_i32, %c0_i32_0 : i32, i32
  }
  func.func @transform_2(%arg0: i32, %arg1: i32) -> (i32, i32) {
    %c0_i32 = arith.constant 0 : i32
    %c0_i32_0 = arith.constant 0 : i32
    %c0_i32_1 = arith.constant 0 : i32
    return %c0_i32, %c0_i32_0 : i32, i32
  }
  func.func @transform_3(%arg0: i32, %arg1: i32) -> (i32, i32) {
    %c0_i32 = arith.constant 0 : i32
    %c0_i32_0 = arith.constant 0 : i32
    %c0_i32_1 = arith.constant 0 : i32
    return %c0_i32, %c0_i32_0 : i32, i32
  }
  func.func @transform_4(%arg0: i32, %arg1: i32) -> (i32, i32) {
    %c0_i32 = arith.constant 0 : i32
    %c0_i32_0 = arith.constant 0 : i32
    %c0_i32_1 = arith.constant 0 : i32
    return %c0_i32, %c0_i32_0 : i32, i32
  }
  func.func @transform_5(%arg0: i32, %arg1: i32) -> (i32, i32) {
    %c0_i32 = arith.constant 0 : i32
    %c0_i32_0 = arith.constant 0 : i32
    %c0_i32_1 = arith.constant 0 : i32
    return %c0_i32, %c0_i32_0 : i32, i32
  }
  func.func @transform_6(%arg0: i32, %arg1: i32) -> (i32, i32) {
    %c0_i32 = arith.constant 0 : i32
    %c0_i32_0 = arith.constant 0 : i32
    %c0_i32_1 = arith.constant 0 : i32
    return %c0_i32, %c0_i32_0 : i32, i32
  }
  func.func @transform_7(%arg0: i32, %arg1: i32) -> (i32, i32) {
    %c0_i32 = arith.constant 0 : i32
    %c0_i32_0 = arith.constant 0 : i32
    %c0_i32_1 = arith.constant 0 : i32
    return %c0_i32, %c0_i32_0 : i32, i32
  }
  func.func @transform_8(%arg0: i32, %arg1: i32) -> (i32, i32) {
    %c0_i32 = arith.constant 0 : i32
    %c0_i32_0 = arith.constant 0 : i32
    %c0_i32_1 = arith.constant 0 : i32
    return %c0_i32, %c0_i32_0 : i32, i32
  }
  func.func @transform_9(%arg0: i32, %arg1: i32) -> (i32, i32) {
    %c0_i32 = arith.constant 0 : i32
    %c0_i32_0 = arith.constant 0 : i32
    return %arg0, %c0_i32 : i32, i32
  }
}

</mosaic_0001>

<llo_original>
// kernel: tpu_custom_call.1
$region0: #{tpu_custom_call.1}
  #allocation0 [shape = 'u32[]', space=smem, size = 0x4, offset = 0x4, fixed_abs, tag = 'smem constant byte address 0x4 - core index']
  #allocation1 [shape = 'u32[144,128]{1,0:T(1,128)}', space=vmem, size = 0x12000, scoped, tag = 'internal scratch']
  #allocation2 [shape = 'f32[2,8,32]{2,1,0:T(8,128)}', space=vmem, size = 0x2000, scoped, tag = 'scratch operand']
  %s0 = inlined_call_operand.vmem [shape: f32[2,16,16], index: 0, kind: input, shape index: {}]
  %s1 = inlined_call_operand.vmem [shape: f32[32,8], index: 1, kind: input, shape index: {}]
  %s2 = inlined_call_operand.hbm [shape: f32[16,32], index: 2, kind: input, shape index: {}]
  %s3 = inlined_call_operand.vmem [shape: f32[16,32], index: 3, kind: input, shape index: {}]
  %s4 = inlined_call_operand.vmem [shape: f32[32,4], index: 4, kind: input, shape index: {}]
  %s5 = inlined_call_operand.vmem [shape: f32[32,32], index: 5, kind: input, shape index: {}]
  %s6 = inlined_call_operand.hbm [shape: f32[32,32], index: 6, kind: input, shape index: {}]
  %s7 = inlined_call_operand.vmem [shape: f32[1,32], index: 7, kind: input, shape index: {}]
  %s8 = inlined_call_operand.vmem [shape: f32[1,32], index: 8, kind: input, shape index: {}]
  %s9 = inlined_call_operand.hbm [shape: f32[2,32], index: 9, kind: output, shape index: {}]
  %s10 = sld [smem:[#allocation0]]
  $region62: #{tpu_custom_call.1} parent=0
    _
  %s12 = ssub.s32 1, %s10
  %s13 = scalar_select 0, %s12, %s10
  $region1: #{tpu_custom_call.1} parent=0
    #allocation3 [shape = 'u8[8192]{0}', space=vmem, size = 0x2000, scoped, tag = 'input window, operand 2, single buffered']
    #allocation4 [shape = 's32[1]{0}', space=sflag, size = 0x4, scoped, tag = 'scoped memory for tpu_custom_call.1']
    #allocation5 [shape = 's32[1]{0}', space=sflag, size = 0x4, scoped, tag = 'scoped memory for tpu_custom_call.1']
    #allocation6 [shape = 'u8[16384]{0}', space=vmem, size = 0x4000, scoped, tag = 'input window, operand 6, single buffered']
    #allocation7 [shape = 's32[1]{0}', space=sflag, size = 0x4, scoped, tag = 'scoped memory for tpu_custom_call.1']
    #allocation8 [shape = 'u8[1024]{0}', space=vmem, size = 0x400, scoped, tag = 'output window, operand 0, single buffered']
    %14 = vsyncpa [#allocation4], 0
    %15 = vsyncpa [#allocation7], 0
    %16 = vsyncpa [#allocation5], 0
    // Predicated region
    $region2: #{tpu_custom_call.1} parent=1 // pred_check
      _
    $region3: #{tpu_custom_call.1} parent=1 // pred_check_branch
      %18 = sbr.rel (0) target = $region5
    $region4: #{tpu_custom_call.1} parent=1 // pred_region
      _
    $region5: #{tpu_custom_call.1} parent=1 // pred_fallthru
      _
    // Predicated region
    $region6: #{tpu_custom_call.1} parent=1 // pred_check
      _
    $region7: #{tpu_custom_call.1} parent=1 // pred_check_branch
      %20 = sbr.rel (0) target = $region9
    $region8: #{tpu_custom_call.1} parent=1 // pred_region
      _
    $region9: #{tpu_custom_call.1} parent=1 // pred_fallthru
      _
    // Predicated region
    $region10: #{tpu_custom_call.1} parent=1 // pred_check
      _
    $region11: #{tpu_custom_call.1} parent=1 // pred_check_branch
      %22 = sbr.rel (0) target = $region13
    $region12: #{tpu_custom_call.1} parent=1 // pred_region
      %s24 = ssub.s32 256, 256
      %25 = vsyncadd [#allocation4], %s24
      %s26 = sshll.u32 [#allocation3], 4
      %s27 = int_to_ptr.vmem [resolvable:$true] %s26
      %32 = dma.hbm_to_vmem [thread:$0]  %s2, 256, %s27, [#allocation4], 128, 128, 8
    $region13: #{tpu_custom_call.1} parent=1 // pred_fallthru
      _
    // Predicated region
    $region14: #{tpu_custom_call.1} parent=1 // pred_check
      _
    $region15: #{tpu_custom_call.1} parent=1 // pred_check_branch
      %34 = sbr.rel (0) target = $region17
    $region16: #{tpu_custom_call.1} parent=1 // pred_region
      _
    $region17: #{tpu_custom_call.1} parent=1 // pred_fallthru
      _
    // Predicated region
    $region18: #{tpu_custom_call.1} parent=1 // pred_check
      _
    $region19: #{tpu_custom_call.1} parent=1 // pred_check_branch
      %36 = sbr.rel (0) target = $region21
    $region20: #{tpu_custom_call.1} parent=1 // pred_region
      _
    $region21: #{tpu_custom_call.1} parent=1 // pred_fallthru
      _
    // Predicated region
    $region22: #{tpu_custom_call.1} parent=1 // pred_check
      _
    $region23: #{tpu_custom_call.1} parent=1 // pred_check_branch
      %38 = sbr.rel (0) target = $region25
    $region24: #{tpu_custom_call.1} parent=1 // pred_region
      _
    $region25: #{tpu_custom_call.1} parent=1 // pred_fallthru
      _
    // Predicated region
    $region26: #{tpu_custom_call.1} parent=1 // pred_check
      _
    $region27: #{tpu_custom_call.1} parent=1 // pred_check_branch
      %40 = sbr.rel (0) target = $region29
    $region28: #{tpu_custom_call.1} parent=1 // pred_region
      %s42 = ssub.s32 512, 512
      %43 = vsyncadd [#allocation7], %s42
      %s44 = sshll.u32 [#allocation6], 4
      %s45 = int_to_ptr.vmem [resolvable:$true] %s44
      %50 = dma.hbm_to_vmem [thread:$0]  %s6, 512, %s45, [#allocation7], 128, 128, 8
    $region29: #{tpu_custom_call.1} parent=1 // pred_fallthru
      _
    // Predicated region
    $region30: #{tpu_custom_call.1} parent=1 // pred_check
      _
    $region31: #{tpu_custom_call.1} parent=1 // pred_check_branch
      %52 = sbr.rel (0) target = $region33
    $region32: #{tpu_custom_call.1} parent=1 // pred_region
      _
    $region33: #{tpu_custom_call.1} parent=1 // pred_fallthru
      _
    // Predicated region
    $region34: #{tpu_custom_call.1} parent=1 // pred_check
      _
    $region35: #{tpu_custom_call.1} parent=1 // pred_check_branch
      %54 = sbr.rel (0) target = $region37
    $region36: #{tpu_custom_call.1} parent=1 // pred_region
      _
    $region37: #{tpu_custom_call.1} parent=1 // pred_fallthru
      _
    // Predicated region
    $region38: #{tpu_custom_call.1} parent=1 // pred_check
      _
    $region39: #{tpu_custom_call.1} parent=1 // pred_check_branch
      %56 = sbr.rel (0) target = $region41
    $region40: #{tpu_custom_call.1} parent=1 // pred_region
      %57 = dma.done [#allocation4], 256
    $region41: #{tpu_custom_call.1} parent=1 // pred_fallthru
      _
    // Predicated region
    $region42: #{tpu_custom_call.1} parent=1 // pred_check
      _
    $region43: #{tpu_custom_call.1} parent=1 // pred_check_branch
      %59 = sbr.rel (0) target = $region45
    $region44: #{tpu_custom_call.1} parent=1 // pred_region
      %60 = dma.done [#allocation7], 512
    $region45: #{tpu_custom_call.1} parent=1 // pred_fallthru
      _
    %p61 = scmp.eq.s32.totalorder 0, 0
    // Predicated region
    $region46: #{tpu_custom_call.1} parent=1 // pred_check
      %p62 = pneg %p61
    $region47: #{tpu_custom_call.1} parent=1 // pred_check_branch
      %64 = sbr.rel (%p62) target = $region49
    $region48: #{tpu_custom_call.1} parent=1 // pred_region
      %vm65 = vcmask 261120
      %66 = vst.msk [vmem:[#allocation2] sm:$0xff] %vm65, 0.0
      %67 = vst.msk [vmem:[#allocation2 + $0x8] sm:$0xff] %vm65, 0.0
    $region49: #{tpu_custom_call.1} parent=1 // pred_fallthru
      _
    %v68 = vld [vmem:[#allocation2] sm:$0xff]
    %v69 = vld [vmem:[#allocation2 + $0x8] sm:$0xff]
    %v70 = vld [vmem:[%s0] sm:$0xff]
    %v71 = vld [vmem:[%s0 + $0x8] sm:$0xff]
    %v72 = vld [vmem:[%s0 + $0x10] sm:$0xff]
    %v73 = vld [vmem:[%s0 + $0x18] sm:$0xff]
    %v74 = vld [vmem:[%s1] sm:$0xff]
    %v75 = vld [vmem:[%s1 + $0x8] sm:$0xff]
    %v76 = vld [vmem:[%s1 + $0x10] sm:$0xff]
    %v77 = vld [vmem:[%s1 + $0x18] sm:$0xff]
    %v78 = vld [vmem:[#allocation3] sm:$0xff]
    %v79 = vld [vmem:[#allocation3 + $0x8] sm:$0xff]
    %vm80 = vcmask 130048
    %v82 = vsel %vm80, %v70, 0
    %v85 = vsel %vm80, %v71, 0
    %v88 = vsel %vm80, %v72, 0
    %v91 = vsel %vm80, %v73, 0
    %93 = vmatprep.subr.mxu0 0.0
    %94 = vmatpush1.msra.mxu0 0.0
    %95 = vmatprep.subr.mxu0 0.0
    %96 = vmatpush1.msra.mxu0 0.0
    %97 = vmatprep.subr.mxu0 0.0
    %98 = vmatpush1.msra.mxu0 0.0
    %99 = vmatprep.subr.mxu0 0.0
    %100 = vmatpush1.msra.mxu0 0.0
    %101 = vmatprep.subr.mxu0 0.0
    %102 = vmatpush1.msra.mxu0 0.0
    %103 = vmatprep.subr.mxu0 0.0
    %104 = vmatpush1.msra.mxu0 0.0
    %105 = vmatprep.subr.mxu0 0.0
    %106 = vmatpush1.msra.mxu0 0.0
    %107 = vmatprep.subr.mxu0 0.0
    %108 = vmatpush1.msra.mxu0 0.0
    %109 = vmatprep.subr.mxu0 0.0
    %110 = vmatpush1.msra.mxu0 0.0
    %111 = vmatprep.subr.mxu0 0.0
    %112 = vmatpush1.msra.mxu0 0.0
    %113 = vmatprep.subr.mxu0 0.0
    %114 = vmatpush1.msra.mxu0 0.0
    %115 = vmatprep.subr.mxu0 0.0
    %116 = vmatpush1.msra.mxu0 0.0
    %117 = vmatprep.subr.mxu0 0.0
    %118 = vmatpush1.msra.mxu0 0.0
    %119 = vmatprep.subr.mxu0 0.0
    %120 = vmatpush1.msra.mxu0 0.0
    %121 = vmatprep.subr.mxu0 0.0
    %122 = vmatpush1.msra.mxu0 %v79
    %123 = vmatprep.subr.mxu0 0.0
    %124 = vmatpush1.msra.mxu0 %v78
    %125 = vmatprep.subr.mxu0 0.0
    %126 = vmatpush2.msra.mxu0 0.0
    %127 = vmatprep.subr.mxu0 0.0
    %128 = vmatpush2.msra.mxu0 0.0
    %129 = vmatprep.subr.mxu0 0.0
    %130 = vmatpush2.msra.mxu0 0.0
    %131 = vmatprep.subr.mxu0 0.0
    %132 = vmatpush2.msra.mxu0 0.0
    %133 = vmatprep.subr.mxu0 0.0
    %134 = vmatpush2.msra.mxu0 0.0
    %135 = vmatprep.subr.mxu0 0.0
    %136 = vmatpush2.msra.mxu0 0.0
    %137 = vmatprep.subr.mxu0 0.0
    %138 = vmatpush2.msra.mxu0 0.0
    %139 = vmatprep.subr.mxu0 0.0
    %140 = vmatpush2.msra.mxu0 0.0
    %141 = vmatprep.subr.mxu0 0.0
    %142 = vmatpush2.msra.mxu0 0.0
    %143 = vmatprep.subr.mxu0 0.0
    %144 = vmatpush2.msra.mxu0 0.0
    %145 = vmatprep.subr.mxu0 0.0
    %146 = vmatpush2.msra.mxu0 0.0
    %147 = vmatprep.subr.mxu0 0.0
    %148 = vmatpush2.msra.mxu0 0.0
    %149 = vmatprep.subr.mxu0 0.0
    %150 = vmatpush2.msra.mxu0 0.0
    %151 = vmatprep.subr.mxu0 0.0
    %152 = vmatpush2.msra.mxu0 0.0
    %153 = vmatprep.subr.mxu0 0.0
    %154 = vmatpush2.msra.mxu0 0.0
    %155 = vmatprep.subr.mxu0 0.0
    %156 = vmatpush2.msra.mxu0 0.0
    %157 = vmatprep.mubr.f32.mxu0 0.0
    %158 = vmatmul.mubr.f32.gmra.mxu0 %v82
    %v159 = vpop.f32.mrf.mxu0
    %v160 = vadd.f32 0.0, %v159
    %v161 = vpop.f32.mrf.mxu0
    %162 = vmatprep.mubr.f32.mxu0 0.0
    %163 = vmatmul.mubr.f32.gmra.mxu0 %v85
    %v164 = vpop.f32.mrf.mxu0
    %v165 = vadd.f32 0.0, %v164
    %v166 = vpop.f32.mrf.mxu0
    %167 = vmatprep.mubr.f32.mxu0 0.0
    %168 = vmatmul.mubr.f32.gmra.mxu0 %v88
    %v169 = vpop.f32.mrf.mxu0
    %v170 = vadd.f32 0.0, %v169
    %v171 = vpop.f32.mrf.mxu0
    %172 = vmatprep.mubr.f32.mxu0 0.0
    %173 = vmatmul.mubr.f32.gmra.mxu0 %v91
    %v174 = vpop.f32.mrf.mxu0
    %v175 = vadd.f32 0.0, %v174
    %v176 = vpop.f32.mrf.mxu0
    %177 = vdwg.mxu0
    %v178 = vld [vmem:[%s3] sm:$0xff]
    %v179 = vld [vmem:[%s3 + $0x8] sm:$0xff]
    %180 = vmatprep.subr.mxu0 0.0
    %181 = vmatpush1.msra.mxu0 0.0
    %182 = vmatprep.subr.mxu0 0.0
    %183 = vmatpush1.msra.mxu0 0.0
    %184 = vmatprep.subr.mxu0 0.0
    %185 = vmatpush1.msra.mxu0 0.0
    %186 = vmatprep.subr.mxu0 0.0
    %187 = vmatpush1.msra.mxu0 0.0
    %188 = vmatprep.subr.mxu0 0.0
    %189 = vmatpush1.msra.mxu0 0.0
    %190 = vmatprep.subr.mxu0 0.0
    %191 = vmatpush1.msra.mxu0 0.0
    %192 = vmatprep.subr.mxu0 0.0
    %193 = vmatpush1.msra.mxu0 0.0
    %194 = vmatprep.subr.mxu0 0.0
    %195 = vmatpush1.msra.mxu0 0.0
    %196 = vmatprep.subr.mxu0 0.0
    %197 = vmatpush1.msra.mxu0 0.0
    %198 = vmatprep.subr.mxu0 0.0
    %199 = vmatpush1.msra.mxu0 0.0
    %200 = vmatprep.subr.mxu0 0.0
    %201 = vmatpush1.msra.mxu0 0.0
    %202 = vmatprep.subr.mxu0 0.0
    %203 = vmatpush1.msra.mxu0 0.0
    %204 = vmatprep.subr.mxu0 0.0
    %205 = vmatpush1.msra.mxu0 0.0
    %206 = vmatprep.subr.mxu0 0.0
    %207 = vmatpush1.msra.mxu0 0.0
    %208 = vmatprep.subr.mxu0 0.0
    %209 = vmatpush1.msra.mxu0 %v179
    %210 = vmatprep.subr.mxu0 0.0
    %211 = vmatpush1.msra.mxu0 %v178
    %212 = vmatprep.subr.mxu0 0.0
    %213 = vmatpush2.msra.mxu0 0.0
    %214 = vmatprep.subr.mxu0 0.0
    %215 = vmatpush2.msra.mxu0 0.0
    %216 = vmatprep.subr.mxu0 0.0
    %217 = vmatpush2.msra.mxu0 0.0
    %218 = vmatprep.subr.mxu0 0.0
    %219 = vmatpush2.msra.mxu0 0.0
    %220 = vmatprep.subr.mxu0 0.0
    %221 = vmatpush2.msra.mxu0 0.0
    %222 = vmatprep.subr.mxu0 0.0
    %223 = vmatpush2.msra.mxu0 0.0
    %224 = vmatprep.subr.mxu0 0.0
    %225 = vmatpush2.msra.mxu0 0.0
    %226 = vmatprep.subr.mxu0 0.0
    %227 = vmatpush2.msra.mxu0 0.0
    %228 = vmatprep.subr.mxu0 0.0
    %229 = vmatpush2.msra.mxu0 0.0
    %230 = vmatprep.subr.mxu0 0.0
    %231 = vmatpush2.msra.mxu0 0.0
    %232 = vmatprep.subr.mxu0 0.0
    %233 = vmatpush2.msra.mxu0 0.0
    %234 = vmatprep.subr.mxu0 0.0
    %235 = vmatpush2.msra.mxu0 0.0
    %236 = vmatprep.subr.mxu0 0.0
    %237 = vmatpush2.msra.mxu0 0.0
    %238 = vmatprep.subr.mxu0 0.0
    %239 = vmatpush2.msra.mxu0 0.0
    %240 = vmatprep.subr.mxu0 0.0
    %241 = vmatpush2.msra.mxu0 0.0
    %242 = vmatprep.subr.mxu0 0.0
    %243 = vmatpush2.msra.mxu0 0.0
    %244 = vmatprep.mubr.f32.mxu0 0.0
    %245 = vmatmul.mubr.f32.gmra.mxu0 %v82
    %v246 = vpop.f32.mrf.mxu0
    %v247 = vadd.f32 0.0, %v246
    %v248 = vpop.f32.mrf.mxu0
    %249 = vmatprep.mubr.f32.mxu0 0.0
    %250 = vmatmul.mubr.f32.gmra.mxu0 %v85
    %v251 = vpop.f32.mrf.mxu0
    %v252 = vadd.f32 0.0, %v251
    %v253 = vpop.f32.mrf.mxu0
    %254 = vmatprep.mubr.f32.mxu0 0.0
    %255 = vmatmul.mubr.f32.gmra.mxu0 %v88
    %v256 = vpop.f32.mrf.mxu0
    %v257 = vadd.f32 0.0, %v256
    %v258 = vpop.f32.mrf.mxu0
    %259 = vmatprep.mubr.f32.mxu0 0.0
    %260 = vmatmul.mubr.f32.gmra.mxu0 %v91
    %v261 = vpop.f32.mrf.mxu0
    %v262 = vadd.f32 0.0, %v261
    %v263 = vpop.f32.mrf.mxu0
    %264 = vdwg.mxu0
    %vm265 = vcmask 261120
    %v267 = vsel %vm265, %v160, 0
    %v270 = vsel %vm265, %v165, 0
    %v273 = vsel %vm265, %v170, 0
    %v276 = vsel %vm265, %v175, 0
    %278 = vmatprep.subr.mxu0 0.0
    %279 = vmatpush1.msra.mxu0 0.0
    %280 = vmatprep.subr.mxu0 0.0
    %281 = vmatpush1.msra.mxu0 0.0
    %282 = vmatprep.subr.mxu0 0.0
    %283 = vmatpush1.msra.mxu0 0.0
    %284 = vmatprep.subr.mxu0 0.0
    %285 = vmatpush1.msra.mxu0 0.0
    %286 = vmatprep.subr.mxu0 0.0
    %287 = vmatpush1.msra.mxu0 0.0
    %288 = vmatprep.subr.mxu0 0.0
    %289 = vmatpush1.msra.mxu0 0.0
    %290 = vmatprep.subr.mxu0 0.0
    %291 = vmatpush1.msra.mxu0 0.0
    %292 = vmatprep.subr.mxu0 0.0
    %293 = vmatpush1.msra.mxu0 0.0
    %294 = vmatprep.subr.mxu0 0.0
    %295 = vmatpush1.msra.mxu0 0.0
    %296 = vmatprep.subr.mxu0 0.0
    %297 = vmatpush1.msra.mxu0 0.0
    %298 = vmatprep.subr.mxu0 0.0
    %299 = vmatpush1.msra.mxu0 0.0
    %300 = vmatprep.subr.mxu0 0.0
    %301 = vmatpush1.msra.mxu0 0.0
    %302 = vmatprep.subr.mxu0 0.0
    %303 = vmatpush1.msra.mxu0 %v77
    %304 = vmatprep.subr.mxu0 0.0
    %305 = vmatpush1.msra.mxu0 %v76
    %306 = vmatprep.subr.mxu0 0.0
    %307 = vmatpush1.msra.mxu0 %v75
    %308 = vmatprep.subr.mxu0 0.0
    %309 = vmatpush1.msra.mxu0 %v74
    %310 = vmatprep.subr.mxu0 0.0
    %311 = vmatpush2.msra.mxu0 0.0
    %312 = vmatprep.subr.mxu0 0.0
    %313 = vmatpush2.msra.mxu0 0.0
    %314 = vmatprep.subr.mxu0 0.0
    %315 = vmatpush2.msra.mxu0 0.0
    %316 = vmatprep.subr.mxu0 0.0
    %317 = vmatpush2.msra.mxu0 0.0
    %318 = vmatprep.subr.mxu0 0.0
    %319 = vmatpush2.msra.mxu0 0.0
    %320 = vmatprep.subr.mxu0 0.0
    %321 = vmatpush2.msra.mxu0 0.0
    %322 = vmatprep.subr.mxu0 0.0
    %323 = vmatpush2.msra.mxu0 0.0
    %324 = vmatprep.subr.mxu0 0.0
    %325 = vmatpush2.msra.mxu0 0.0
    %326 = vmatprep.subr.mxu0 0.0
    %327 = vmatpush2.msra.mxu0 0.0
    %328 = vmatprep.subr.mxu0 0.0
    %329 = vmatpush2.msra.mxu0 0.0
    %330 = vmatprep.subr.mxu0 0.0
    %331 = vmatpush2.msra.mxu0 0.0
    %332 = vmatprep.subr.mxu0 0.0
    %333 = vmatpush2.msra.mxu0 0.0
    %334 = vmatprep.subr.mxu0 0.0
    %335 = vmatpush2.msra.mxu0 0.0
    %336 = vmatprep.subr.mxu0 0.0
    %337 = vmatpush2.msra.mxu0 0.0
    %338 = vmatprep.subr.mxu0 0.0
    %339 = vmatpush2.msra.mxu0 0.0
    %340 = vmatprep.subr.mxu0 0.0
    %341 = vmatpush2.msra.mxu0 0.0
    %342 = vmatprep.mubr.f32.mxu0 0.0
    %343 = vmatmul.mubr.f32.gmra.mxu0 %v267
    %v344 = vpop.f32.mrf.mxu0
    %v345 = vadd.f32 0.0, %v344
    %v346 = vpop.f32.mrf.mxu0
    %347 = vmatprep.mubr.f32.mxu0 0.0
    %348 = vmatmul.mubr.f32.gmra.mxu0 %v270
    %v349 = vpop.f32.mrf.mxu0
    %v350 = vadd.f32 0.0, %v349
    %v351 = vpop.f32.mrf.mxu0
    %352 = vmatprep.mubr.f32.mxu0 0.0
    %353 = vmatmul.mubr.f32.gmra.mxu0 %v273
    %v354 = vpop.f32.mrf.mxu0
    %v355 = vadd.f32 0.0, %v354
    %v356 = vpop.f32.mrf.mxu0
    %357 = vmatprep.mubr.f32.mxu0 0.0
    %358 = vmatmul.mubr.f32.gmra.mxu0 %v276
    %v359 = vpop.f32.mrf.mxu0
    %v360 = vadd.f32 0.0, %v359
    %v361 = vpop.f32.mrf.mxu0
    %362 = vdwg.mxu0
    %v363 = vxor.u32 %v345, 2147483648
    %v364 = vxor.u32 %v350, 2147483648
    %v365 = vxor.u32 %v355, 2147483648
    %v366 = vxor.u32 %v360, 2147483648
    %v367 = vmul.f32 %v363, 1.442695
    %v368 = vpow.pop %v367
    %v369 = vmul.f32 %v364, 1.442695
    %v370 = vpow.pop %v369
    %v371 = vmul.f32 %v365, 1.442695
    %v372 = vpow.pop %v371
    %v373 = vmul.f32 %v366, 1.442695
    %v374 = vpow.pop %v373
    %v375 = vadd.f32 %v368, 1.0
    %v376 = vadd.f32 %v370, 1.0
    %v377 = vadd.f32 %v372, 1.0
    %v378 = vadd.f32 %v374, 1.0
    %v379 = vrcp.pop %v375
    %v380 = vmul.f32 1.0, %v379
    %v381 = vrcp.pop %v376
    %v382 = vmul.f32 1.0, %v381
    %v383 = vrcp.pop %v377
    %v384 = vmul.f32 1.0, %v383
    %v385 = vrcp.pop %v378
    %v386 = vmul.f32 1.0, %v385
    %v387 = vadd.f32 %v380, 1e-08
    %v388 = vadd.f32 %v382, 1e-08
    %v389 = vadd.f32 %v384, 1e-08
    %v390 = vadd.f32 %v386, 1e-08
    %vm391 = vcmask 64512
    %v392 = vsel %vm391, %v387, 0.0
    %393 = vadd.xlane.f32.xlu0 %v392
    %v394 = vpop.xlane.xlu0 %393
    %v395 = vsel %vm391, %v388, 0.0
    %396 = vadd.xlane.f32.xlu0 %v395
    %v397 = vpop.xlane.xlu0 %396
    %v398 = vsel %vm391, %v389, 0.0
    %399 = vadd.xlane.f32.xlu0 %v398
    %v400 = vpop.xlane.xlu0 %399
    %v401 = vsel %vm391, %v390, 0.0
    %402 = vadd.xlane.f32.xlu0 %v401
    %v403 = vpop.xlane.xlu0 %402
    %v404 = vrcp.pop %v394
    %v405 = vrcp.pop %v397
    %v406 = vrcp.pop %v400
    %v407 = vrcp.pop %v403
    %v408 = vmul.f32 %v387, %v404
    %v409 = vmul.f32 %v388, %v405
    %v410 = vmul.f32 %v389, %v406
    %v411 = vmul.f32 %v390, %v407
    %412 = vxpose.xlu0.b32.start [1/16] %v408, 128
    %413 = vxpose.xlu0.b32.cont [2/16] %v409, 128
    %414 = vxpose.xlu0.b32.cont [3/16] 0.0, 128
    %415 = vxpose.xlu0.b32.cont [4/16] 0.0, 128
    %416 = vxpose.xlu0.b32.cont [5/16] 0.0, 128
    %417 = vxpose.xlu0.b32.cont [6/16] 0.0, 128
    %418 = vxpose.xlu0.b32.cont [7/16] 0.0, 128
    %419 = vxpose.xlu0.b32.cont [8/16] 0.0, 128
    %420 = vxpose.xlu0.b32.cont [9/16] 0.0, 128
    %421 = vxpose.xlu0.b32.cont [10/16] 0.0, 128
    %422 = vxpose.xlu0.b32.cont [11/16] 0.0, 128
    %423 = vxpose.xlu0.b32.cont [12/16] 0.0, 128
    %424 = vxpose.xlu0.b32.cont [13/16] 0.0, 128
    %425 = vxpose.xlu0.b32.cont [14/16] 0.0, 128
    %426 = vxpose.xlu0.b32.cont [15/16] 0.0, 128
    %427 = vxpose.xlu0.b32.end [16/16] 0.0, 128
    %v428 = vpop.trf.xlu0
    %v429 = vpop.trf.xlu0
    %v430 = vpop.trf.xlu0
    %v431 = vpop.trf.xlu0
    %v432 = vpop.trf.xlu0
    %v433 = vpop.trf.xlu0
    %v434 = vpop.trf.xlu0
    %v435 = vpop.trf.xlu0
    %v436 = vpop.trf.xlu0
    %v437 = vpop.trf.xlu0
    %v438 = vpop.trf.xlu0
    %v439 = vpop.trf.xlu0
    %v440 = vpop.trf.xlu0
    %v441 = vpop.trf.xlu0
    %v442 = vpop.trf.xlu0
    %v443 = vpop.trf.xlu0
    %v445 = vsel %vm80, %v428, 0
    %447 = vmatprep.subr.mxu0 0.0
    %448 = vmatpush1.msra.mxu0 0.0
    %449 = vmatprep.subr.mxu0 0.0
    %450 = vmatpush1.msra.mxu0 0.0
    %451 = vmatprep.subr.mxu0 0.0
    %452 = vmatpush1.msra.mxu0 0.0
    %453 = vmatprep.subr.mxu0 0.0
    %454 = vmatpush1.msra.mxu0 0.0
    %455 = vmatprep.subr.mxu0 0.0
    %456 = vmatpush1.msra.mxu0 0.0
    %457 = vmatprep.subr.mxu0 0.0
    %458 = vmatpush1.msra.mxu0 0.0
    %459 = vmatprep.subr.mxu0 0.0
    %460 = vmatpush1.msra.mxu0 0.0
    %461 = vmatprep.subr.mxu0 0.0
    %462 = vmatpush1.msra.mxu0 0.0
    %463 = vmatprep.subr.mxu0 0.0
    %464 = vmatpush1.msra.mxu0 0.0
    %465 = vmatprep.subr.mxu0 0.0
    %466 = vmatpush1.msra.mxu0 0.0
    %467 = vmatprep.subr.mxu0 0.0
    %468 = vmatpush1.msra.mxu0 0.0
    %469 = vmatprep.subr.mxu0 0.0
    %470 = vmatpush1.msra.mxu0 0.0
    %471 = vmatprep.subr.mxu0 0.0
    %472 = vmatpush1.msra.mxu0 0.0
    %473 = vmatprep.subr.mxu0 0.0
    %474 = vmatpush1.msra.mxu0 0.0
    %475 = vmatprep.subr.mxu0 0.0
    %476 = vmatpush1.msra.mxu0 %v252
    %477 = vmatprep.subr.mxu0 0.0
    %478 = vmatpush1.msra.mxu0 %v247
    %479 = vmatprep.subr.mxu0 0.0
    %480 = vmatpush2.msra.mxu0 0.0
    %481 = vmatprep.subr.mxu0 0.0
    %482 = vmatpush2.msra.mxu0 0.0
    %483 = vmatprep.subr.mxu0 0.0
    %484 = vmatpush2.msra.mxu0 0.0
    %485 = vmatprep.subr.mxu0 0.0
    %486 = vmatpush2.msra.mxu0 0.0
    %487 = vmatprep.subr.mxu0 0.0
    %488 = vmatpush2.msra.mxu0 0.0
    %489 = vmatprep.subr.mxu0 0.0
    %490 = vmatpush2.msra.mxu0 0.0
    %491 = vmatprep.subr.mxu0 0.0
    %492 = vmatpush2.msra.mxu0 0.0
    %493 = vmatprep.subr.mxu0 0.0
    %494 = vmatpush2.msra.mxu0 0.0
    %495 = vmatprep.subr.mxu0 0.0
    %496 = vmatpush2.msra.mxu0 0.0
    %497 = vmatprep.subr.mxu0 0.0
    %498 = vmatpush2.msra.mxu0 0.0
    %499 = vmatprep.subr.mxu0 0.0
    %500 = vmatpush2.msra.mxu0 0.0
    %501 = vmatprep.subr.mxu0 0.0
    %502 = vmatpush2.msra.mxu0 0.0
    %503 = vmatprep.subr.mxu0 0.0
    %504 = vmatpush2.msra.mxu0 0.0
    %505 = vmatprep.subr.mxu0 0.0
    %506 = vmatpush2.msra.mxu0 0.0
    %507 = vmatprep.subr.mxu0 0.0
    %508 = vmatpush2.msra.mxu0 0.0
    %509 = vmatprep.subr.mxu0 0.0
    %510 = vmatpush2.msra.mxu0 0.0
    %511 = vmatprep.mubr.f32.mxu0 0.0
    %512 = vmatmul.mubr.f32.gmra.mxu0 %v445
    %v513 = vpop.f32.mrf.mxu0
    %v514 = vadd.f32 0.0, %v513
    %v515 = vpop.f32.mrf.mxu0
    %516 = vdwg.mxu0
    %517 = vxpose.xlu0.b32.start [1/16] %v410, 128
    %518 = vxpose.xlu0.b32.cont [2/16] %v411, 128
    %519 = vxpose.xlu0.b32.cont [3/16] 0.0, 128
    %520 = vxpose.xlu0.b32.cont [4/16] 0.0, 128
    %521 = vxpose.xlu0.b32.cont [5/16] 0.0, 128
    %522 = vxpose.xlu0.b32.cont [6/16] 0.0, 128
    %523 = vxpose.xlu0.b32.cont [7/16] 0.0, 128
    %524 = vxpose.xlu0.b32.cont [8/16] 0.0, 128
    %525 = vxpose.xlu0.b32.cont [9/16] 0.0, 128
    %526 = vxpose.xlu0.b32.cont [10/16] 0.0, 128
    %527 = vxpose.xlu0.b32.cont [11/16] 0.0, 128
    %528 = vxpose.xlu0.b32.cont [12/16] 0.0, 128
    %529 = vxpose.xlu0.b32.cont [13/16] 0.0, 128
    %530 = vxpose.xlu0.b32.cont [14/16] 0.0, 128
    %531 = vxpose.xlu0.b32.cont [15/16] 0.0, 128
    %532 = vxpose.xlu0.b32.end [16/16] 0.0, 128
    %v533 = vpop.trf.xlu0
    %v534 = vpop.trf.xlu0
    %v535 = vpop.trf.xlu0
    %v536 = vpop.trf.xlu0
    %v537 = vpop.trf.xlu0
    %v538 = vpop.trf.xlu0
    %v539 = vpop.trf.xlu0
    %v540 = vpop.trf.xlu0
    %v541 = vpop.trf.xlu0
    %v542 = vpop.trf.xlu0
    %v543 = vpop.trf.xlu0
    %v544 = vpop.trf.xlu0
    %v545 = vpop.trf.xlu0
    %v546 = vpop.trf.xlu0
    %v547 = vpop.trf.xlu0
    %v548 = vpop.trf.xlu0
    %v550 = vsel %vm80, %v533, 0
    %552 = vmatprep.subr.mxu0 0.0
    %553 = vmatpush1.msra.mxu0 0.0
    %554 = vmatprep.subr.mxu0 0.0
    %555 = vmatpush1.msra.mxu0 0.0
    %556 = vmatprep.subr.mxu0 0.0
    %557 = vmatpush1.msra.mxu0 0.0
    %558 = vmatprep.subr.mxu0 0.0
    %559 = vmatpush1.msra.mxu0 0.0
    %560 = vmatprep.subr.mxu0 0.0
    %561 = vmatpush1.msra.mxu0 0.0
    %562 = vmatprep.subr.mxu0 0.0
    %563 = vmatpush1.msra.mxu0 0.0
    %564 = vmatprep.subr.mxu0 0.0
    %565 = vmatpush1.msra.mxu0 0.0
    %566 = vmatprep.subr.mxu0 0.0
    %567 = vmatpush1.msra.mxu0 0.0
    %568 = vmatprep.subr.mxu0 0.0
    %569 = vmatpush1.msra.mxu0 0.0
    %570 = vmatprep.subr.mxu0 0.0
    %571 = vmatpush1.msra.mxu0 0.0
    %572 = vmatprep.subr.mxu0 0.0
    %573 = vmatpush1.msra.mxu0 0.0
    %574 = vmatprep.subr.mxu0 0.0
    %575 = vmatpush1.msra.mxu0 0.0
    %576 = vmatprep.subr.mxu0 0.0
    %577 = vmatpush1.msra.mxu0 0.0
    %578 = vmatprep.subr.mxu0 0.0
    %579 = vmatpush1.msra.mxu0 0.0
    %580 = vmatprep.subr.mxu0 0.0
    %581 = vmatpush1.msra.mxu0 %v262
    %582 = vmatprep.subr.mxu0 0.0
    %583 = vmatpush1.msra.mxu0 %v257
    %584 = vmatprep.subr.mxu0 0.0
    %585 = vmatpush2.msra.mxu0 0.0
    %586 = vmatprep.subr.mxu0 0.0
    %587 = vmatpush2.msra.mxu0 0.0
    %588 = vmatprep.subr.mxu0 0.0
    %589 = vmatpush2.msra.mxu0 0.0
    %590 = vmatprep.subr.mxu0 0.0
    %591 = vmatpush2.msra.mxu0 0.0
    %592 = vmatprep.subr.mxu0 0.0
    %593 = vmatpush2.msra.mxu0 0.0
    %594 = vmatprep.subr.mxu0 0.0
    %595 = vmatpush2.msra.mxu0 0.0
    %596 = vmatprep.subr.mxu0 0.0
    %597 = vmatpush2.msra.mxu0 0.0
    %598 = vmatprep.subr.mxu0 0.0
    %599 = vmatpush2.msra.mxu0 0.0
    %600 = vmatprep.subr.mxu0 0.0
    %601 = vmatpush2.msra.mxu0 0.0
    %602 = vmatprep.subr.mxu0 0.0
    %603 = vmatpush2.msra.mxu0 0.0
    %604 = vmatprep.subr.mxu0 0.0
    %605 = vmatpush2.msra.mxu0 0.0
    %606 = vmatprep.subr.mxu0 0.0
    %607 = vmatpush2.msra.mxu0 0.0
    %608 = vmatprep.subr.mxu0 0.0
    %609 = vmatpush2.msra.mxu0 0.0
    %610 = vmatprep.subr.mxu0 0.0
    %611 = vmatpush2.msra.mxu0 0.0
    %612 = vmatprep.subr.mxu0 0.0
    %613 = vmatpush2.msra.mxu0 0.0
    %614 = vmatprep.subr.mxu0 0.0
    %615 = vmatpush2.msra.mxu0 0.0
    %616 = vmatprep.mubr.f32.mxu0 0.0
    %617 = vmatmul.mubr.f32.gmra.mxu0 %v550
    %v618 = vpop.f32.mrf.mxu0
    %v619 = vadd.f32 0.0, %v618
    %v620 = vpop.f32.mrf.mxu0
    %621 = vdwg.mxu0
    %v622 = vadd.f32 %v68, %v514
    %v623 = vadd.f32 %v69, %v619
    %624 = vst.msk [vmem:[#allocation2] sm:$0xff] %vm265, %v622
    %625 = vst.msk [vmem:[#allocation2 + $0x8] sm:$0xff] %vm265, %v623
    // Predicated region
    $region50: #{tpu_custom_call.1} parent=1 // pred_check
      %p626 = pneg %p61
    $region51: #{tpu_custom_call.1} parent=1 // pred_check_branch
      %628 = sbr.rel (%p626) target = $region53
    $region52: #{tpu_custom_call.1} parent=1 // pred_region
      %v629 = vld [vmem:[#allocation2] sm:$0xff]
      %v630 = vld [vmem:[#allocation2 + $0x8] sm:$0xff]
      %v631 = vld [vmem:[%s4] sm:$0xff]
      %v632 = vld [vmem:[%s4 + $0x8] sm:$0xff]
      %v633 = vld [vmem:[%s4 + $0x10] sm:$0xff]
      %v634 = vld [vmem:[%s4 + $0x18] sm:$0xff]
      %v635 = vld [vmem:[%s5] sm:$0xff]
      %v636 = vld [vmem:[%s5 + $0x8] sm:$0xff]
      %v637 = vld [vmem:[%s5 + $0x10] sm:$0xff]
      %v638 = vld [vmem:[%s5 + $0x18] sm:$0xff]
      %v640 = vsel %vm265, %v629, 0
      %v643 = vsel %vm265, %v630, 0
      %645 = vmatprep.subr.mxu0 0.0
      %646 = vmatpush1.msra.mxu0 0.0
      %647 = vmatprep.subr.mxu0 0.0
      %648 = vmatpush1.msra.mxu0 0.0
      %649 = vmatprep.subr.mxu0 0.0
      %650 = vmatpush1.msra.mxu0 0.0
      %651 = vmatprep.subr.mxu0 0.0
      %652 = vmatpush1.msra.mxu0 0.0
      %653 = vmatprep.subr.mxu0 0.0
      %654 = vmatpush1.msra.mxu0 0.0
      %655 = vmatprep.subr.mxu0 0.0
      %656 = vmatpush1.msra.mxu0 0.0
      %657 = vmatprep.subr.mxu0 0.0
      %658 = vmatpush1.msra.mxu0 0.0
      %659 = vmatprep.subr.mxu0 0.0
      %660 = vmatpush1.msra.mxu0 0.0
      %661 = vmatprep.subr.mxu0 0.0
      %662 = vmatpush1.msra.mxu0 0.0
      %663 = vmatprep.subr.mxu0 0.0
      %664 = vmatpush1.msra.mxu0 0.0
      %665 = vmatprep.subr.mxu0 0.0
      %666 = vmatpush1.msra.mxu0 0.0
      %667 = vmatprep.subr.mxu0 0.0
      %668 = vmatpush1.msra.mxu0 0.0
      %669 = vmatprep.subr.mxu0 0.0
      %670 = vmatpush1.msra.mxu0 %v638
      %671 = vmatprep.subr.mxu0 0.0
      %672 = vmatpush1.msra.mxu0 %v637
      %673 = vmatprep.subr.mxu0 0.0
      %674 = vmatpush1.msra.mxu0 %v636
      %675 = vmatprep.subr.mxu0 0.0
      %676 = vmatpush1.msra.mxu0 %v635
      %677 = vmatprep.subr.mxu0 0.0
      %678 = vmatpush2.msra.mxu0 0.0
      %679 = vmatprep.subr.mxu0 0.0
      %680 = vmatpush2.msra.mxu0 0.0
      %681 = vmatprep.subr.mxu0 0.0
      %682 = vmatpush2.msra.mxu0 0.0
      %683 = vmatprep.subr.mxu0 0.0
      %684 = vmatpush2.msra.mxu0 0.0
      %685 = vmatprep.subr.mxu0 0.0
      %686 = vmatpush2.msra.mxu0 0.0
      %687 = vmatprep.subr.mxu0 0.0
      %688 = vmatpush2.msra.mxu0 0.0
      %689 = vmatprep.subr.mxu0 0.0
      %690 = vmatpush2.msra.mxu0 0.0
      %691 = vmatprep.subr.mxu0 0.0
      %692 = vmatpush2.msra.mxu0 0.0
      %693 = vmatprep.subr.mxu0 0.0
      %694 = vmatpush2.msra.mxu0 0.0
      %695 = vmatprep.subr.mxu0 0.0
      %696 = vmatpush2.msra.mxu0 0.0
      %697 = vmatprep.subr.mxu0 0.0
      %698 = vmatpush2.msra.mxu0 0.0
      %699 = vmatprep.subr.mxu0 0.0
      %700 = vmatpush2.msra.mxu0 0.0
      %701 = vmatprep.subr.mxu0 0.0
      %702 = vmatpush2.msra.mxu0 0.0
      %703 = vmatprep.subr.mxu0 0.0
      %704 = vmatpush2.msra.mxu0 0.0
      %705 = vmatprep.subr.mxu0 0.0
      %706 = vmatpush2.msra.mxu0 0.0
      %707 = vmatprep.subr.mxu0 0.0
      %708 = vmatpush2.msra.mxu0 0.0
      %709 = vmatprep.mubr.f32.mxu0 0.0
      %710 = vmatmul.mubr.f32.gmra.mxu0 %v640
      %v711 = vpop.f32.mrf.mxu0
      %v712 = vadd.f32 0.0, %v711
      %v713 = vpop.f32.mrf.mxu0
      %714 = vmatprep.mubr.f32.mxu0 0.0
      %715 = vmatmul.mubr.f32.gmra.mxu0 %v643
      %v716 = vpop.f32.mrf.mxu0
      %v717 = vadd.f32 0.0, %v716
      %v718 = vpop.f32.mrf.mxu0
      %719 = vdwg.mxu0
      %v720 = vld [vmem:[#allocation6] sm:$0xff]
      %v721 = vld [vmem:[#allocation6 + $0x8] sm:$0xff]
      %v722 = vld [vmem:[#allocation6 + $0x10] sm:$0xff]
      %v723 = vld [vmem:[#allocation6 + $0x18] sm:$0xff]
      %724 = vmatprep.subr.mxu0 0.0
      %725 = vmatpush1.msra.mxu0 0.0
      %726 = vmatprep.subr.mxu0 0.0
      %727 = vmatpush1.msra.mxu0 0.0
      %728 = vmatprep.subr.mxu0 0.0
      %729 = vmatpush1.msra.mxu0 0.0
      %730 = vmatprep.subr.mxu0 0.0
      %731 = vmatpush1.msra.mxu0 0.0
      %732 = vmatprep.subr.mxu0 0.0
      %733 = vmatpush1.msra.mxu0 0.0
      %734 = vmatprep.subr.mxu0 0.0
      %735 = vmatpush1.msra.mxu0 0.0
      %736 = vmatprep.subr.mxu0 0.0
      %737 = vmatpush1.msra.mxu0 0.0
      %738 = vmatprep.subr.mxu0 0.0
      %739 = vmatpush1.msra.mxu0 0.0
      %740 = vmatprep.subr.mxu0 0.0
      %741 = vmatpush1.msra.mxu0 0.0
      %742 = vmatprep.subr.mxu0 0.0
      %743 = vmatpush1.msra.mxu0 0.0
      %744 = vmatprep.subr.mxu0 0.0
      %745 = vmatpush1.msra.mxu0 0.0
      %746 = vmatprep.subr.mxu0 0.0
      %747 = vmatpush1.msra.mxu0 0.0
      %748 = vmatprep.subr.mxu0 0.0
      %749 = vmatpush1.msra.mxu0 %v723
      %750 = vmatprep.subr.mxu0 0.0
      %751 = vmatpush1.msra.mxu0 %v722
      %752 = vmatprep.subr.mxu0 0.0
      %753 = vmatpush1.msra.mxu0 %v721
      %754 = vmatprep.subr.mxu0 0.0
      %755 = vmatpush1.msra.mxu0 %v720
      %756 = vmatprep.subr.mxu0 0.0
      %757 = vmatpush2.msra.mxu0 0.0
      %758 = vmatprep.subr.mxu0 0.0
      %759 = vmatpush2.msra.mxu0 0.0
      %760 = vmatprep.subr.mxu0 0.0
      %761 = vmatpush2.msra.mxu0 0.0
      %762 = vmatprep.subr.mxu0 0.0
      %763 = vmatpush2.msra.mxu0 0.0
      %764 = vmatprep.subr.mxu0 0.0
      %765 = vmatpush2.msra.mxu0 0.0
      %766 = vmatprep.subr.mxu0 0.0
      %767 = vmatpush2.msra.mxu0 0.0
      %768 = vmatprep.subr.mxu0 0.0
      %769 = vmatpush2.msra.mxu0 0.0
      %770 = vmatprep.subr.mxu0 0.0
      %771 = vmatpush2.msra.mxu0 0.0
      %772 = vmatprep.subr.mxu0 0.0
      %773 = vmatpush2.msra.mxu0 0.0
      %774 = vmatprep.subr.mxu0 0.0
      %775 = vmatpush2.msra.mxu0 0.0
      %776 = vmatprep.subr.mxu0 0.0
      %777 = vmatpush2.msra.mxu0 0.0
      %778 = vmatprep.subr.mxu0 0.0
      %779 = vmatpush2.msra.mxu0 0.0
      %780 = vmatprep.subr.mxu0 0.0
      %781 = vmatpush2.msra.mxu0 0.0
      %782 = vmatprep.subr.mxu0 0.0
      %783 = vmatpush2.msra.mxu0 0.0
      %784 = vmatprep.subr.mxu0 0.0
      %785 = vmatpush2.msra.mxu0 0.0
      %786 = vmatprep.subr.mxu0 0.0
      %787 = vmatpush2.msra.mxu0 0.0
      %788 = vmatprep.mubr.f32.mxu0 0.0
      %789 = vmatmul.mubr.f32.gmra.mxu0 %v640
      %v790 = vpop.f32.mrf.mxu0
      %v791 = vadd.f32 0.0, %v790
      %v792 = vpop.f32.mrf.mxu0
      %793 = vmatprep.mubr.f32.mxu0 0.0
      %794 = vmatmul.mubr.f32.gmra.mxu0 %v643
      %v795 = vpop.f32.mrf.mxu0
      %v796 = vadd.f32 0.0, %v795
      %v797 = vpop.f32.mrf.mxu0
      %798 = vdwg.mxu0
      %v800 = vsel %vm265, %v712, 0
      %v803 = vsel %vm265, %v717, 0
      %805 = vmatprep.subr.mxu0 0.0
      %806 = vmatpush1.msra.mxu0 0.0
      %807 = vmatprep.subr.mxu0 0.0
      %808 = vmatpush1.msra.mxu0 0.0
      %809 = vmatprep.subr.mxu0 0.0
      %810 = vmatpush1.msra.mxu0 0.0
      %811 = vmatprep.subr.mxu0 0.0
      %812 = vmatpush1.msra.mxu0 0.0
      %813 = vmatprep.subr.mxu0 0.0
      %814 = vmatpush1.msra.mxu0 0.0
      %815 = vmatprep.subr.mxu0 0.0
      %816 = vmatpush1.msra.mxu0 0.0
      %817 = vmatprep.subr.mxu0 0.0
      %818 = vmatpush1.msra.mxu0 0.0
      %819 = vmatprep.subr.mxu0 0.0
      %820 = vmatpush1.msra.mxu0 0.0
      %821 = vmatprep.subr.mxu0 0.0
      %822 = vmatpush1.msra.mxu0 0.0
      %823 = vmatprep.subr.mxu0 0.0
      %824 = vmatpush1.msra.mxu0 0.0
      %825 = vmatprep.subr.mxu0 0.0
      %826 = vmatpush1.msra.mxu0 0.0
      %827 = vmatprep.subr.mxu0 0.0
      %828 = vmatpush1.msra.mxu0 0.0
      %829 = vmatprep.subr.mxu0 0.0
      %830 = vmatpush1.msra.mxu0 %v634
      %831 = vmatprep.subr.mxu0 0.0
      %832 = vmatpush1.msra.mxu0 %v633
      %833 = vmatprep.subr.mxu0 0.0
      %834 = vmatpush1.msra.mxu0 %v632
      %835 = vmatprep.subr.mxu0 0.0
      %836 = vmatpush1.msra.mxu0 %v631
      %837 = vmatprep.subr.mxu0 0.0
      %838 = vmatpush2.msra.mxu0 0.0
      %839 = vmatprep.subr.mxu0 0.0
      %840 = vmatpush2.msra.mxu0 0.0
      %841 = vmatprep.subr.mxu0 0.0
      %842 = vmatpush2.msra.mxu0 0.0
      %843 = vmatprep.subr.mxu0 0.0
      %844 = vmatpush2.msra.mxu0 0.0
      %845 = vmatprep.subr.mxu0 0.0
      %846 = vmatpush2.msra.mxu0 0.0
      %847 = vmatprep.subr.mxu0 0.0
      %848 = vmatpush2.msra.mxu0 0.0
      %849 = vmatprep.subr.mxu0 0.0
      %850 = vmatpush2.msra.mxu0 0.0
      %851 = vmatprep.subr.mxu0 0.0
      %852 = vmatpush2.msra.mxu0 0.0
      %853 = vmatprep.subr.mxu0 0.0
      %854 = vmatpush2.msra.mxu0 0.0
      %855 = vmatprep.subr.mxu0 0.0
      %856 = vmatpush2.msra.mxu0 0.0
      %857 = vmatprep.subr.mxu0 0.0
      %858 = vmatpush2.msra.mxu0 0.0
      %859 = vmatprep.subr.mxu0 0.0
      %860 = vmatpush2.msra.mxu0 0.0
      %861 = vmatprep.subr.mxu0 0.0
      %862 = vmatpush2.msra.mxu0 0.0
      %863 = vmatprep.subr.mxu0 0.0
      %864 = vmatpush2.msra.mxu0 0.0
      %865 = vmatprep.subr.mxu0 0.0
      %866 = vmatpush2.msra.mxu0 0.0
      %867 = vmatprep.subr.mxu0 0.0
      %868 = vmatpush2.msra.mxu0 0.0
      %869 = vmatprep.mubr.f32.mxu0 0.0
      %870 = vmatmul.mubr.f32.gmra.mxu0 %v800
      %v871 = vpop.f32.mrf.mxu0
      %v872 = vadd.f32 0.0, %v871
      %v873 = vpop.f32.mrf.mxu0
      %874 = vmatprep.mubr.f32.mxu0 0.0
      %875 = vmatmul.mubr.f32.gmra.mxu0 %v803
      %v876 = vpop.f32.mrf.mxu0
      %v877 = vadd.f32 0.0, %v876
      %v878 = vpop.f32.mrf.mxu0
      %879 = vdwg.mxu0
      %v880 = vxor.u32 %v872, 2147483648
      %v881 = vxor.u32 %v877, 2147483648
      %v882 = vmul.f32 %v880, 1.442695
      %v883 = vpow.pop %v882
      %v884 = vmul.f32 %v881, 1.442695
      %v885 = vpow.pop %v884
      %v886 = vadd.f32 %v883, 1.0
      %v887 = vadd.f32 %v885, 1.0
      %v888 = vrcp.pop %v886
      %v889 = vmul.f32 1.0, %v888
      %v890 = vrcp.pop %v887
      %v891 = vmul.f32 1.0, %v890
      %v892 = vadd.f32 %v889, 1e-08
      %v893 = vadd.f32 %v891, 1e-08
      %vm894 = vcmask 31744
      %v895 = vsel %vm894, %v892, 0.0
      %896 = vadd.xlane.f32.xlu0 %v895
      %v897 = vpop.xlane.xlu0 %896
      %v898 = vsel %vm894, %v893, 0.0
      %899 = vadd.xlane.f32.xlu0 %v898
      %v900 = vpop.xlane.xlu0 %899
      %v901 = vrcp.pop %v897
      %v902 = vrcp.pop %v900
      %v903 = vmul.f32 %v892, %v901
      %v904 = vmul.f32 %v893, %v902
      %905 = vxpose.xlu0.b32.start [1/16] %v903, 128
      %906 = vxpose.xlu0.b32.cont [2/16] 0.0, 128
      %907 = vxpose.xlu0.b32.cont [3/16] 0.0, 128
      %908 = vxpose.xlu0.b32.cont [4/16] 0.0, 128
      %909 = vxpose.xlu0.b32.cont [5/16] 0.0, 128
      %910 = vxpose.xlu0.b32.cont [6/16] 0.0, 128
      %911 = vxpose.xlu0.b32.cont [7/16] 0.0, 128
      %912 = vxpose.xlu0.b32.cont [8/16] 0.0, 128
      %913 = vxpose.xlu0.b32.cont [9/16] 0.0, 128
      %914 = vxpose.xlu0.b32.cont [10/16] 0.0, 128
      %915 = vxpose.xlu0.b32.cont [11/16] 0.0, 128
      %916 = vxpose.xlu0.b32.cont [12/16] 0.0, 128
      %917 = vxpose.xlu0.b32.cont [13/16] 0.0, 128
      %918 = vxpose.xlu0.b32.cont [14/16] 0.0, 128
      %919 = vxpose.xlu0.b32.cont [15/16] 0.0, 128
      %920 = vxpose.xlu0.b32.end [16/16] 0.0, 128
      %v921 = vpop.trf.xlu0
      %v922 = vpop.trf.xlu0
      %v923 = vpop.trf.xlu0
      %v924 = vpop.trf.xlu0
      %v925 = vpop.trf.xlu0
      %v926 = vpop.trf.xlu0
      %v927 = vpop.trf.xlu0
      %v928 = vpop.trf.xlu0
      %v929 = vpop.trf.xlu0
      %v930 = vpop.trf.xlu0
      %v931 = vpop.trf.xlu0
      %v932 = vpop.trf.xlu0
      %v933 = vpop.trf.xlu0
      %v934 = vpop.trf.xlu0
      %v935 = vpop.trf.xlu0
      %v936 = vpop.trf.xlu0
      %v938 = vsel %vm391, %v921, 0
      %940 = vmatprep.subr.mxu0 0.0
      %941 = vmatpush1.msra.mxu0 0.0
      %942 = vmatprep.subr.mxu0 0.0
      %943 = vmatpush1.msra.mxu0 0.0
      %944 = vmatprep.subr.mxu0 0.0
      %945 = vmatpush1.msra.mxu0 0.0
      %946 = vmatprep.subr.mxu0 0.0
      %947 = vmatpush1.msra.mxu0 0.0
      %948 = vmatprep.subr.mxu0 0.0
      %949 = vmatpush1.msra.mxu0 0.0
      %950 = vmatprep.subr.mxu0 0.0
      %951 = vmatpush1.msra.mxu0 0.0
      %952 = vmatprep.subr.mxu0 0.0
      %953 = vmatpush1.msra.mxu0 0.0
      %954 = vmatprep.subr.mxu0 0.0
      %955 = vmatpush1.msra.mxu0 0.0
      %956 = vmatprep.subr.mxu0 0.0
      %957 = vmatpush1.msra.mxu0 0.0
      %958 = vmatprep.subr.mxu0 0.0
      %959 = vmatpush1.msra.mxu0 0.0
      %960 = vmatprep.subr.mxu0 0.0
      %961 = vmatpush1.msra.mxu0 0.0
      %962 = vmatprep.subr.mxu0 0.0
      %963 = vmatpush1.msra.mxu0 0.0
      %964 = vmatprep.subr.mxu0 0.0
      %965 = vmatpush1.msra.mxu0 0.0
      %966 = vmatprep.subr.mxu0 0.0
      %967 = vmatpush1.msra.mxu0 0.0
      %968 = vmatprep.subr.mxu0 0.0
      %969 = vmatpush1.msra.mxu0 0.0
      %970 = vmatprep.subr.mxu0 0.0
      %971 = vmatpush1.msra.mxu0 %v791
      %972 = vmatprep.subr.mxu0 0.0
      %973 = vmatpush2.msra.mxu0 0.0
      %974 = vmatprep.subr.mxu0 0.0
      %975 = vmatpush2.msra.mxu0 0.0
      %976 = vmatprep.subr.mxu0 0.0
      %977 = vmatpush2.msra.mxu0 0.0
      %978 = vmatprep.subr.mxu0 0.0
      %979 = vmatpush2.msra.mxu0 0.0
      %980 = vmatprep.subr.mxu0 0.0
      %981 = vmatpush2.msra.mxu0 0.0
      %982 = vmatprep.subr.mxu0 0.0
      %983 = vmatpush2.msra.mxu0 0.0
      %984 = vmatprep.subr.mxu0 0.0
      %985 = vmatpush2.msra.mxu0 0.0
      %986 = vmatprep.subr.mxu0 0.0
      %987 = vmatpush2.msra.mxu0 0.0
      %988 = vmatprep.subr.mxu0 0.0
      %989 = vmatpush2.msra.mxu0 0.0
      %990 = vmatprep.subr.mxu0 0.0
      %991 = vmatpush2.msra.mxu0 0.0
      %992 = vmatprep.subr.mxu0 0.0
      %993 = vmatpush2.msra.mxu0 0.0
      %994 = vmatprep.subr.mxu0 0.0
      %995 = vmatpush2.msra.mxu0 0.0
      %996 = vmatprep.subr.mxu0 0.0
      %997 = vmatpush2.msra.mxu0 0.0
      %998 = vmatprep.subr.mxu0 0.0
      %999 = vmatpush2.msra.mxu0 0.0
      %1000 = vmatprep.subr.mxu0 0.0
      %1001 = vmatpush2.msra.mxu0 0.0
      %1002 = vmatprep.subr.mxu0 0.0
      %1003 = vmatpush2.msra.mxu0 0.0
      %1004 = vmatprep.mubr.f32.mxu0 0.0
      %1005 = vmatmul.mubr.f32.gmra.mxu0 %v938
      %v1006 = vpop.f32.mrf.mxu0
      %v1007 = vadd.f32 0.0, %v1006
      %v1008 = vpop.f32.mrf.mxu0
      %1009 = vdwg.mxu0
      %1010 = vxpose.xlu0.b32.start [1/16] %v904, 128
      %1011 = vxpose.xlu0.b32.cont [2/16] 0.0, 128
      %1012 = vxpose.xlu0.b32.cont [3/16] 0.0, 128
      %1013 = vxpose.xlu0.b32.cont [4/16] 0.0, 128
      %1014 = vxpose.xlu0.b32.cont [5/16] 0.0, 128
      %1015 = vxpose.xlu0.b32.cont [6/16] 0.0, 128
      %1016 = vxpose.xlu0.b32.cont [7/16] 0.0, 128
      %1017 = vxpose.xlu0.b32.cont [8/16] 0.0, 128
      %1018 = vxpose.xlu0.b32.cont [9/16] 0.0, 128
      %1019 = vxpose.xlu0.b32.cont [10/16] 0.0, 128
      %1020 = vxpose.xlu0.b32.cont [11/16] 0.0, 128
      %1021 = vxpose.xlu0.b32.cont [12/16] 0.0, 128
      %1022 = vxpose.xlu0.b32.cont [13/16] 0.0, 128
      %1023 = vxpose.xlu0.b32.cont [14/16] 0.0, 128
      %1024 = vxpose.xlu0.b32.cont [15/16] 0.0, 128
      %1025 = vxpose.xlu0.b32.end [16/16] 0.0, 128
      %v1026 = vpop.trf.xlu0
      %v1027 = vpop.trf.xlu0
      %v1028 = vpop.trf.xlu0
      %v1029 = vpop.trf.xlu0
      %v1030 = vpop.trf.xlu0
      %v1031 = vpop.trf.xlu0
      %v1032 = vpop.trf.xlu0
      %v1033 = vpop.trf.xlu0
      %v1034 = vpop.trf.xlu0
      %v1035 = vpop.trf.xlu0
      %v1036 = vpop.trf.xlu0
      %v1037 = vpop.trf.xlu0
      %v1038 = vpop.trf.xlu0
      %v1039 = vpop.trf.xlu0
      %v1040 = vpop.trf.xlu0
      %v1041 = vpop.trf.xlu0
      %v1043 = vsel %vm391, %v1026, 0
      %1045 = vmatprep.subr.mxu0 0.0
      %1046 = vmatpush1.msra.mxu0 0.0
      %1047 = vmatprep.subr.mxu0 0.0
      %1048 = vmatpush1.msra.mxu0 0.0
      %1049 = vmatprep.subr.mxu0 0.0
      %1050 = vmatpush1.msra.mxu0 0.0
      %1051 = vmatprep.subr.mxu0 0.0
      %1052 = vmatpush1.msra.mxu0 0.0
      %1053 = vmatprep.subr.mxu0 0.0
      %1054 = vmatpush1.msra.mxu0 0.0
      %1055 = vmatprep.subr.mxu0 0.0
      %1056 = vmatpush1.msra.mxu0 0.0
      %1057 = vmatprep.subr.mxu0 0.0
      %1058 = vmatpush1.msra.mxu0 0.0
      %1059 = vmatprep.subr.mxu0 0.0
      %1060 = vmatpush1.msra.mxu0 0.0
      %1061 = vmatprep.subr.mxu0 0.0
      %1062 = vmatpush1.msra.mxu0 0.0
      %1063 = vmatprep.subr.mxu0 0.0
      %1064 = vmatpush1.msra.mxu0 0.0
      %1065 = vmatprep.subr.mxu0 0.0
      %1066 = vmatpush1.msra.mxu0 0.0
      %1067 = vmatprep.subr.mxu0 0.0
      %1068 = vmatpush1.msra.mxu0 0.0
      %1069 = vmatprep.subr.mxu0 0.0
      %1070 = vmatpush1.msra.mxu0 0.0
      %1071 = vmatprep.subr.mxu0 0.0
      %1072 = vmatpush1.msra.mxu0 0.0
      %1073 = vmatprep.subr.mxu0 0.0
      %1074 = vmatpush1.msra.mxu0 0.0
      %1075 = vmatprep.subr.mxu0 0.0
      %1076 = vmatpush1.msra.mxu0 %v796
      %1077 = vmatprep.subr.mxu0 0.0
      %1078 = vmatpush2.msra.mxu0 0.0
      %1079 = vmatprep.subr.mxu0 0.0
      %1080 = vmatpush2.msra.mxu0 0.0
      %1081 = vmatprep.subr.mxu0 0.0
      %1082 = vmatpush2.msra.mxu0 0.0
      %1083 = vmatprep.subr.mxu0 0.0
      %1084 = vmatpush2.msra.mxu0 0.0
      %1085 = vmatprep.subr.mxu0 0.0
      %1086 = vmatpush2.msra.mxu0 0.0
      %1087 = vmatprep.subr.mxu0 0.0
      %1088 = vmatpush2.msra.mxu0 0.0
      %1089 = vmatprep.subr.mxu0 0.0
      %1090 = vmatpush2.msra.mxu0 0.0
      %1091 = vmatprep.subr.mxu0 0.0
      %1092 = vmatpush2.msra.mxu0 0.0
      %1093 = vmatprep.subr.mxu0 0.0
      %1094 = vmatpush2.msra.mxu0 0.0
      %1095 = vmatprep.subr.mxu0 0.0
      %1096 = vmatpush2.msra.mxu0 0.0
      %1097 = vmatprep.subr.mxu0 0.0
      %1098 = vmatpush2.msra.mxu0 0.0
      %1099 = vmatprep.subr.mxu0 0.0
      %1100 = vmatpush2.msra.mxu0 0.0
      %1101 = vmatprep.subr.mxu0 0.0
      %1102 = vmatpush2.msra.mxu0 0.0
      %1103 = vmatprep.subr.mxu0 0.0
      %1104 = vmatpush2.msra.mxu0 0.0
      %1105 = vmatprep.subr.mxu0 0.0
      %1106 = vmatpush2.msra.mxu0 0.0
      %1107 = vmatprep.subr.mxu0 0.0
      %1108 = vmatpush2.msra.mxu0 0.0
      %1109 = vmatprep.mubr.f32.mxu0 0.0
      %1110 = vmatmul.mubr.f32.gmra.mxu0 %v1043
      %v1111 = vpop.f32.mrf.mxu0
      %v1112 = vadd.f32 0.0, %v1111
      %v1113 = vpop.f32.mrf.mxu0
      %1114 = vdwg.mxu0
      %vm1115 = vcmask 257024
      %v1116 = vsel %vm1115, %v1007, 0.0
      %v1117 = vrot.slane %v1116, 4
      %v1118 = vadd.f32 %v1116, %v1117
      %v1119 = vrot.slane %v1118, 2
      %v1120 = vadd.f32 %v1118, %v1119
      %v1121 = vrot.slane %v1120, 1
      %v1122 = vadd.f32 %v1120, %v1121
      %v1123 = vsel %vm1115, %v1112, 0.0
      %v1124 = vrot.slane %v1123, 4
      %v1125 = vadd.f32 %v1123, %v1124
      %v1126 = vrot.slane %v1125, 2
      %v1127 = vadd.f32 %v1125, %v1126
      %v1128 = vrot.slane %v1127, 1
      %v1129 = vadd.f32 %v1127, %v1128
      %vm1132 = vcmask 1041409
      %v1133 = vsel %vm1132, %v1129, %v1122
      %vm1135 = vcmask 254976
      %v1136 = vsel %vm1135, %v1133, 0.0
      %1137 = vadd.xlane.f32.xlu0 %v1136
      %v1138 = vpop.xlane.xlu0 %1137
      %v1139 = vrcp.pop 32.0
      %v1140 = vmul.f32 %v1138, %v1139
      %v1142 = vrot.slane %v1140, 1
      %v1145 = vsub.f32 %v1122, %v1140
      %v1146 = vsub.f32 %v1129, %v1142
      %v1147 = vmul.f32 %v1145, %v1145
      %v1148 = vmul.f32 %v1146, %v1146
      %v1151 = vrot.slane %v1148, 7
      %v1152 = vsel %vm1132, %v1151, %v1147
      %v1154 = vsel %vm1135, %v1152, 0.0
      %1155 = vadd.xlane.f32.xlu0 %v1154
      %v1156 = vpop.xlane.xlu0 %1155
      %v1157 = vmul.f32 %v1156, %v1139
      %v1158 = vadd.f32 %v1157, 1e-05
      %v1159 = vrsqrt.pop %v1158
      %v1161 = vrot.slane %v1159, 1
      %v1164 = vmul.f32 %v1145, %v1159
      %v1165 = vmul.f32 %v1146, %v1161
      %v1166 = vld [vmem:[%s7] sm:$0x1]
      %v1168 = vlaneseq
      %v1169 = vshrl.u32 %v1168, 7
      %v1170 = vsub.s32 0, %v1169
      %v1171 = vrot.slane %v1166, %v1170
      %v1173 = vmul.f32 %v1164, %v1171
      %v1174 = vmul.f32 %v1165, %v1171
      %v1175 = vld [vmem:[%s8] sm:$0x1]
      %v1177 = vlaneseq
      %v1178 = vshrl.u32 %v1177, 7
      %v1179 = vsub.s32 0, %v1178
      %v1180 = vrot.slane %v1175, %v1179
      %v1182 = vadd.f32 %v1173, %v1180
      %v1183 = vadd.f32 %v1174, %v1180
      %v1186 = vrot.slane %v1183, 7
      %v1187 = vsel %vm1132, %v1186, %v1182
      %1189 = vst.msk [vmem:[#allocation8] sm:$0x3] %vm1135, %v1187
    $region53: #{tpu_custom_call.1} parent=1 // pred_fallthru
      _
    // Predicated region
    $region54: #{tpu_custom_call.1} parent=1 // pred_check
      _
    $region55: #{tpu_custom_call.1} parent=1 // pred_check_branch
      %1191 = sbr.rel (0) target = $region57
    $region56: #{tpu_custom_call.1} parent=1 // pred_region
      %s1193 = ssub.s32 32, 32
      %1194 = vsyncadd [#allocation5], %s1193
      %s1196 = sshll.u32 [#allocation8], 4
      %s1197 = int_to_ptr.vmem [resolvable:$true] %s1196
      %1199 = dma.vmem_to_hbm [thread:$0]  %s1197, 32, %s9, [#allocation5]
    $region57: #{tpu_custom_call.1} parent=1 // pred_fallthru
      _
    // Predicated region
    $region58: #{tpu_custom_call.1} parent=1 // pred_check
      _
    $region59: #{tpu_custom_call.1} parent=1 // pred_check_branch
      %1201 = sbr.rel (0) target = $region61
    $region60: #{tpu_custom_call.1} parent=1 // pred_region
      %1202 = dma.done [#allocation5], 32
    $region61: #{tpu_custom_call.1} parent=1 // pred_fallthru
      _
    %1203 = vsyncpa [#allocation4], 1
    %1204 = vsyncpa [#allocation7], 1
    %1205 = vsyncpa [#allocation5], 1

// kernel: tpu_custom_call.1
$region0: #{tpu_custom_call.1}
  #allocation0 [shape = 'u32[]', space=smem, size = 0x4, offset = 0x4, fixed_abs, tag = 'smem constant byte address 0x4 - core index']
  #allocation1 [shape = 'u32[144,128]{1,0:T(1,128)}', space=vmem, size = 0x12000, scoped, tag = 'internal scratch']
  #allocation2 [shape = 'f32[2,8,32]{2,1,0:T(8,128)}', space=vmem, size = 0x2000, scoped, tag = 'scratch operand']
  %s0 = inlined_call_operand.vmem [shape: f32[2,16,16], index: 0, kind: input, shape index: {}]
  %s1 = inlined_call_operand.vmem [shape: f32[32,8], index: 1, kind: input, shape index: {}]
  %s2 = inlined_call_operand.hbm [shape: f32[16,32], index: 2, kind: input, shape index: {}]
  %s3 = inlined_call_operand.vmem [shape: f32[16,32], index: 3, kind: input, shape index: {}]
  %s4 = inlined_call_operand.vmem [shape: f32[32,4], index: 4, kind: input, shape index: {}]
  %s5 = inlined_call_operand.vmem [shape: f32[32,32], index: 5, kind: input, shape index: {}]
  %s6 = inlined_call_operand.hbm [shape: f32[32,32], index: 6, kind: input, shape index: {}]
  %s7 = inlined_call_operand.vmem [shape: f32[1,32], index: 7, kind: input, shape index: {}]
  %s8 = inlined_call_operand.vmem [shape: f32[1,32], index: 8, kind: input, shape index: {}]
  %s9 = inlined_call_operand.hbm [shape: f32[2,32], index: 9, kind: output, shape index: {}]
  %s10 = sld [smem:[#allocation0]]
  $region62: #{tpu_custom_call.1} parent=0
    _
  %s12 = ssub.s32 1, %s10
  %s13 = scalar_select 0, %s12, %s10
  $region1: #{tpu_custom_call.1} parent=0
    #allocation3 [shape = 'u8[8192]{0}', space=vmem, size = 0x2000, scoped, tag = 'input window, operand 2, single buffered']
    #allocation4 [shape = 's32[1]{0}', space=sflag, size = 0x4, scoped, tag = 'scoped memory for tpu_custom_call.1']
    #allocation5 [shape = 's32[1]{0}', space=sflag, size = 0x4, scoped, tag = 'scoped memory for tpu_custom_call.1']
    #allocation6 [shape = 'u8[16384]{0}', space=vmem, size = 0x4000, scoped, tag = 'input window, operand 6, single buffered']
    #allocation7 [shape = 's32[1]{0}', space=sflag, size = 0x4, scoped, tag = 'scoped memory for tpu_custom_call.1']
    #allocation8 [shape = 'u8[1024]{0}', space=vmem, size = 0x400, scoped, tag = 'output window, operand 0, single buffered']
    %14 = vsyncpa [#allocation4], 0
    %15 = vsyncpa [#allocation7], 0
    %16 = vsyncpa [#allocation5], 0
    // Predicated region
    $region2: #{tpu_custom_call.1} parent=1 // pred_check
      _
    $region3: #{tpu_custom_call.1} parent=1 // pred_check_branch
      %18 = sbr.rel (0) target = $region5
    $region4: #{tpu_custom_call.1} parent=1 // pred_region
      _
    $region5: #{tpu_custom_call.1} parent=1 // pred_fallthru
      _
    // Predicated region
    $region6: #{tpu_custom_call.1} parent=1 // pred_check
      _
    $region7: #{tpu_custom_call.1} parent=1 // pred_check_branch
      %20 = sbr.rel (0) target = $region9
    $region8: #{tpu_custom_call.1} parent=1 // pred_region
      _
    $region9: #{tpu_custom_call.1} parent=1 // pred_fallthru
      _
    // Predicated region
    $region10: #{tpu_custom_call.1} parent=1 // pred_check
      _
    $region11: #{tpu_custom_call.1} parent=1 // pred_check_branch
      %22 = sbr.rel (0) target = $region13
    $region12: #{tpu_custom_call.1} parent=1 // pred_region
      %s24 = ssub.s32 256, 256
      %25 = vsyncadd [#allocation4], %s24
      %s26 = sshll.u32 [#allocation3], 4
      %s27 = int_to_ptr.vmem [resolvable:$true] %s26
      %32 = dma.hbm_to_vmem [thread:$0]  %s2, 256, %s27, [#allocation4], 128, 128, 8
    $region13: #{tpu_custom_call.1} parent=1 // pred_fallthru
      _
    // Predicated region
    $region14: #{tpu_custom_call.1} parent=1 // pred_check
      _
    $region15: #{tpu_custom_call.1} parent=1 // pred_check_branch
      %34 = sbr.rel (0) target = $region17
    $region16: #{tpu_custom_call.1} parent=1 // pred_region
      _
    $region17: #{tpu_custom_call.1} parent=1 // pred_fallthru
      _
    // Predicated region
    $region18: #{tpu_custom_call.1} parent=1 // pred_check
      _
    $region19: #{tpu_custom_call.1} parent=1 // pred_check_branch
      %36 = sbr.rel (0) target = $region21
    $region20: #{tpu_custom_call.1} parent=1 // pred_region
      _
    $region21: #{tpu_custom_call.1} parent=1 // pred_fallthru
      _
    // Predicated region
    $region22: #{tpu_custom_call.1} parent=1 // pred_check
      _
    $region23: #{tpu_custom_call.1} parent=1 // pred_check_branch
      %38 = sbr.rel (0) target = $region25
    $region24: #{tpu_custom_call.1} parent=1 // pred_region
      _
    $region25: #{tpu_custom_call.1} parent=1 // pred_fallthru
      _
    // Predicated region
    $region26: #{tpu_custom_call.1} parent=1 // pred_check
      _
    $region27: #{tpu_custom_call.1} parent=1 // pred_check_branch
      %40 = sbr.rel (0) target = $region29
    $region28: #{tpu_custom_call.1} parent=1 // pred_region
      %s42 = ssub.s32 512, 512
      %43 = vsyncadd [#allocation7], %s42
      %s44 = sshll.u32 [#allocation6], 4
      %s45 = int_to_ptr.vmem [resolvable:$true] %s44
      %50 = dma.hbm_to_vmem [thread:$0]  %s6, 512, %s45, [#allocation7], 128, 128, 8
    $region29: #{tpu_custom_call.1} parent=1 // pred_fallthru
      _
    // Predicated region
    $region30: #{tpu_custom_call.1} parent=1 // pred_check
      _
    $region31: #{tpu_custom_call.1} parent=1 // pred_check_branch
      %52 = sbr.rel (0) target = $region33
    $region32: #{tpu_custom_call.1} parent=1 // pred_region
      _
    $region33: #{tpu_custom_call.1} parent=1 // pred_fallthru
      _
    // Predicated region
    $region34: #{tpu_custom_call.1} parent=1 // pred_check
      _
    $region35: #{tpu_custom_call.1} parent=1 // pred_check_branch
      %54 = sbr.rel (0) target = $region37
    $region36: #{tpu_custom_call.1} parent=1 // pred_region
      _
    $region37: #{tpu_custom_call.1} parent=1 // pred_fallthru
      _
    // Predicated region
    $region38: #{tpu_custom_call.1} parent=1 // pred_check
      _
    $region39: #{tpu_custom_call.1} parent=1 // pred_check_branch
      %56 = sbr.rel (0) target = $region41
    $region40: #{tpu_custom_call.1} parent=1 // pred_region
      %57 = dma.done [#allocation4], 256
    $region41: #{tpu_custom_call.1} parent=1 // pred_fallthru
      _
    // Predicated region
    $region42: #{tpu_custom_call.1} parent=1 // pred_check
      _
    $region43: #{tpu_custom_call.1} parent=1 // pred_check_branch
      %59 = sbr.rel (0) target = $region45
    $region44: #{tpu_custom_call.1} parent=1 // pred_region
      %60 = dma.done [#allocation7], 512
    $region45: #{tpu_custom_call.1} parent=1 // pred_fallthru
      _
    %p61 = scmp.eq.s32.totalorder 0, 0
    // Predicated region
    $region46: #{tpu_custom_call.1} parent=1 // pred_check
      %p62 = pneg %p61
    $region47: #{tpu_custom_call.1} parent=1 // pred_check_branch
      %64 = sbr.rel (%p62) target = $region49
    $region48: #{tpu_custom_call.1} parent=1 // pred_region
      %vm65 = vcmask 261120
      %66 = vst.msk [vmem:[#allocation2] sm:$0xff] %vm65, 0.0
      %67 = vst.msk [vmem:[#allocation2 + $0x8] sm:$0xff] %vm65, 0.0
    $region49: #{tpu_custom_call.1} parent=1 // pred_fallthru
      _
    %v68 = vld [vmem:[#allocation2] sm:$0xff]
    %v69 = vld [vmem:[#allocation2 + $0x8] sm:$0xff]
    %v70 = vld [vmem:[%s0] sm:$0xff]
    %v71 = vld [vmem:[%s0 + $0x8] sm:$0xff]
    %v72 = vld [vmem:[%s0 + $0x10] sm:$0xff]
    %v73 = vld [vmem:[%s0 + $0x18] sm:$0xff]
    %v74 = vld [vmem:[%s1] sm:$0xff]
    %v75 = vld [vmem:[%s1 + $0x8] sm:$0xff]
    %v76 = vld [vmem:[%s1 + $0x10] sm:$0xff]
    %v77 = vld [vmem:[%s1 + $0x18] sm:$0xff]
    %v78 = vld [vmem:[#allocation3] sm:$0xff]
    %v79 = vld [vmem:[#allocation3 + $0x8] sm:$0xff]
    %vm80 = vcmask 130048
    %v82 = vsel %vm80, %v70, 0
    %v85 = vsel %vm80, %v71, 0
    %v88 = vsel %vm80, %v72, 0
    %v91 = vsel %vm80, %v73, 0
    %93 = vmatprep.subr.mxu0 0.0
    %94 = vmatpush1.msra.mxu0 0.0
    %95 = vmatprep.subr.mxu0 0.0
    %96 = vmatpush1.msra.mxu0 0.0
    %97 = vmatprep.subr.mxu0 0.0
    %98 = vmatpush1.msra.mxu0 0.0
    %99 = vmatprep.subr.mxu0 0.0
    %100 = vmatpush1.msra.mxu0 0.0
    %101 = vmatprep.subr.mxu0 0.0
    %102 = vmatpush1.msra.mxu0 0.0
    %103 = vmatprep.subr.mxu0 0.0
    %104 = vmatpush1.msra.mxu0 0.0
    %105 = vmatprep.subr.mxu0 0.0
    %106 = vmatpush1.msra.mxu0 0.0
    %107 = vmatprep.subr.mxu0 0.0
    %108 = vmatpush1.msra.mxu0 0.0
    %109 = vmatprep.subr.mxu0 0.0
    %110 = vmatpush1.msra.mxu0 0.0
    %111 = vmatprep.subr.mxu0 0.0
    %112 = vmatpush1.msra.mxu0 0.0
    %113 = vmatprep.subr.mxu0 0.0
    %114 = vmatpush1.msra.mxu0 0.0
    %115 = vmatprep.subr.mxu0 0.0
    %116 = vmatpush1.msra.mxu0 0.0
    %117 = vmatprep.subr.mxu0 0.0
    %118 = vmatpush1.msra.mxu0 0.0
    %119 = vmatprep.subr.mxu0 0.0
    %120 = vmatpush1.msra.mxu0 0.0
    %121 = vmatprep.subr.mxu0 0.0
    %122 = vmatpush1.msra.mxu0 %v79
    %123 = vmatprep.subr.mxu0 0.0
    %124 = vmatpush1.msra.mxu0 %v78
    %125 = vmatprep.subr.mxu0 0.0
    %126 = vmatpush2.msra.mxu0 0.0
    %127 = vmatprep.subr.mxu0 0.0
    %128 = vmatpush2.msra.mxu0 0.0
    %129 = vmatprep.subr.mxu0 0.0
    %130 = vmatpush2.msra.mxu0 0.0
    %131 = vmatprep.subr.mxu0 0.0
    %132 = vmatpush2.msra.mxu0 0.0
    %133 = vmatprep.subr.mxu0 0.0
    %134 = vmatpush2.msra.mxu0 0.0
    %135 = vmatprep.subr.mxu0 0.0
    %136 = vmatpush2.msra.mxu0 0.0
    %137 = vmatprep.subr.mxu0 0.0
    %138 = vmatpush2.msra.mxu0 0.0
    %139 = vmatprep.subr.mxu0 0.0
    %140 = vmatpush2.msra.mxu0 0.0
    %141 = vmatprep.subr.mxu0 0.0
    %142 = vmatpush2.msra.mxu0 0.0
    %143 = vmatprep.subr.mxu0 0.0
    %144 = vmatpush2.msra.mxu0 0.0
    %145 = vmatprep.subr.mxu0 0.0
    %146 = vmatpush2.msra.mxu0 0.0
    %147 = vmatprep.subr.mxu0 0.0
    %148 = vmatpush2.msra.mxu0 0.0
    %149 = vmatprep.subr.mxu0 0.0
    %150 = vmatpush2.msra.mxu0 0.0
    %151 = vmatprep.subr.mxu0 0.0
    %152 = vmatpush2.msra.mxu0 0.0
    %153 = vmatprep.subr.mxu0 0.0
    %154 = vmatpush2.msra.mxu0 0.0
    %155 = vmatprep.subr.mxu0 0.0
    %156 = vmatpush2.msra.mxu0 0.0
    %157 = vmatprep.mubr.f32.mxu0 0.0
    %158 = vmatmul.mubr.f32.gmra.mxu0 %v82
    %v159 = vpop.f32.mrf.mxu0
    %v160 = vadd.f32 0.0, %v159
    %v161 = vpop.f32.mrf.mxu0
    %162 = vmatprep.mubr.f32.mxu0 0.0
    %163 = vmatmul.mubr.f32.gmra.mxu0 %v85
    %v164 = vpop.f32.mrf.mxu0
    %v165 = vadd.f32 0.0, %v164
    %v166 = vpop.f32.mrf.mxu0
    %167 = vmatprep.mubr.f32.mxu0 0.0
    %168 = vmatmul.mubr.f32.gmra.mxu0 %v88
    %v169 = vpop.f32.mrf.mxu0
    %v170 = vadd.f32 0.0, %v169
    %v171 = vpop.f32.mrf.mxu0
    %172 = vmatprep.mubr.f32.mxu0 0.0
    %173 = vmatmul.mubr.f32.gmra.mxu0 %v91
    %v174 = vpop.f32.mrf.mxu0
    %v175 = vadd.f32 0.0, %v174
    %v176 = vpop.f32.mrf.mxu0
    %177 = vdwg.mxu0
    %v178 = vld [vmem:[%s3] sm:$0xff]
    %v179 = vld [vmem:[%s3 + $0x8] sm:$0xff]
    %180 = vmatprep.subr.mxu0 0.0
    %181 = vmatpush1.msra.mxu0 0.0
    %182 = vmatprep.subr.mxu0 0.0
    %183 = vmatpush1.msra.mxu0 0.0
    %184 = vmatprep.subr.mxu0 0.0
    %185 = vmatpush1.msra.mxu0 0.0
    %186 = vmatprep.subr.mxu0 0.0
    %187 = vmatpush1.msra.mxu0 0.0
    %188 = vmatprep.subr.mxu0 0.0
    %189 = vmatpush1.msra.mxu0 0.0
    %190 = vmatprep.subr.mxu0 0.0
    %191 = vmatpush1.msra.mxu0 0.0
    %192 = vmatprep.subr.mxu0 0.0
    %193 = vmatpush1.msra.mxu0 0.0
    %194 = vmatprep.subr.mxu0 0.0
    %195 = vmatpush1.msra.mxu0 0.0
    %196 = vmatprep.subr.mxu0 0.0
    %197 = vmatpush1.msra.mxu0 0.0
    %198 = vmatprep.subr.mxu0 0.0
    %199 = vmatpush1.msra.mxu0 0.0
    %200 = vmatprep.subr.mxu0 0.0
    %201 = vmatpush1.msra.mxu0 0.0
    %202 = vmatprep.subr.mxu0 0.0
    %203 = vmatpush1.msra.mxu0 0.0
    %204 = vmatprep.subr.mxu0 0.0
    %205 = vmatpush1.msra.mxu0 0.0
    %206 = vmatprep.subr.mxu0 0.0
    %207 = vmatpush1.msra.mxu0 0.0
    %208 = vmatprep.subr.mxu0 0.0
    %209 = vmatpush1.msra.mxu0 %v179
    %210 = vmatprep.subr.mxu0 0.0
    %211 = vmatpush1.msra.mxu0 %v178
    %212 = vmatprep.subr.mxu0 0.0
    %213 = vmatpush2.msra.mxu0 0.0
    %214 = vmatprep.subr.mxu0 0.0
    %215 = vmatpush2.msra.mxu0 0.0
    %216 = vmatprep.subr.mxu0 0.0
    %217 = vmatpush2.msra.mxu0 0.0
    %218 = vmatprep.subr.mxu0 0.0
    %219 = vmatpush2.msra.mxu0 0.0
    %220 = vmatprep.subr.mxu0 0.0
    %221 = vmatpush2.msra.mxu0 0.0
    %222 = vmatprep.subr.mxu0 0.0
    %223 = vmatpush2.msra.mxu0 0.0
    %224 = vmatprep.subr.mxu0 0.0
    %225 = vmatpush2.msra.mxu0 0.0
    %226 = vmatprep.subr.mxu0 0.0
    %227 = vmatpush2.msra.mxu0 0.0
    %228 = vmatprep.subr.mxu0 0.0
    %229 = vmatpush2.msra.mxu0 0.0
    %230 = vmatprep.subr.mxu0 0.0
    %231 = vmatpush2.msra.mxu0 0.0
    %232 = vmatprep.subr.mxu0 0.0
    %233 = vmatpush2.msra.mxu0 0.0
    %234 = vmatprep.subr.mxu0 0.0
    %235 = vmatpush2.msra.mxu0 0.0
    %236 = vmatprep.subr.mxu0 0.0
    %237 = vmatpush2.msra.mxu0 0.0
    %238 = vmatprep.subr.mxu0 0.0
    %239 = vmatpush2.msra.mxu0 0.0
    %240 = vmatprep.subr.mxu0 0.0
    %241 = vmatpush2.msra.mxu0 0.0
    %242 = vmatprep.subr.mxu0 0.0
    %243 = vmatpush2.msra.mxu0 0.0
    %244 = vmatprep.mubr.f32.mxu0 0.0
    %245 = vmatmul.mubr.f32.gmra.mxu0 %v82
    %v246 = vpop.f32.mrf.mxu0
    %v247 = vadd.f32 0.0, %v246
    %v248 = vpop.f32.mrf.mxu0
    %249 = vmatprep.mubr.f32.mxu0 0.0
    %250 = vmatmul.mubr.f32.gmra.mxu0 %v85
    %v251 = vpop.f32.mrf.mxu0
    %v252 = vadd.f32 0.0, %v251
    %v253 = vpop.f32.mrf.mxu0
    %254 = vmatprep.mubr.f32.mxu0 0.0
    %255 = vmatmul.mubr.f32.gmra.mxu0 %v88
    %v256 = vpop.f32.mrf.mxu0
    %v257 = vadd.f32 0.0, %v256
    %v258 = vpop.f32.mrf.mxu0
    %259 = vmatprep.mubr.f32.mxu0 0.0
    %260 = vmatmul.mubr.f32.gmra.mxu0 %v91
    %v261 = vpop.f32.mrf.mxu0
    %v262 = vadd.f32 0.0, %v261
    %v263 = vpop.f32.mrf.mxu0
    %264 = vdwg.mxu0
    %vm265 = vcmask 261120
    %v267 = vsel %vm265, %v160, 0
    %v270 = vsel %vm265, %v165, 0
    %v273 = vsel %vm265, %v170, 0
    %v276 = vsel %vm265, %v175, 0
    %278 = vmatprep.subr.mxu0 0.0
    %279 = vmatpush1.msra.mxu0 0.0
    %280 = vmatprep.subr.mxu0 0.0
    %281 = vmatpush1.msra.mxu0 0.0
    %282 = vmatprep.subr.mxu0 0.0
    %283 = vmatpush1.msra.mxu0 0.0
    %284 = vmatprep.subr.mxu0 0.0
    %285 = vmatpush1.msra.mxu0 0.0
    %286 = vmatprep.subr.mxu0 0.0
    %287 = vmatpush1.msra.mxu0 0.0
    %288 = vmatprep.subr.mxu0 0.0
    %289 = vmatpush1.msra.mxu0 0.0
    %290 = vmatprep.subr.mxu0 0.0
    %291 = vmatpush1.msra.mxu0 0.0
    %292 = vmatprep.subr.mxu0 0.0
    %293 = vmatpush1.msra.mxu0 0.0
    %294 = vmatprep.subr.mxu0 0.0
    %295 = vmatpush1.msra.mxu0 0.0
    %296 = vmatprep.subr.mxu0 0.0
    %297 = vmatpush1.msra.mxu0 0.0
    %298 = vmatprep.subr.mxu0 0.0
    %299 = vmatpush1.msra.mxu0 0.0
    %300 = vmatprep.subr.mxu0 0.0
    %301 = vmatpush1.msra.mxu0 0.0
    %302 = vmatprep.subr.mxu0 0.0
    %303 = vmatpush1.msra.mxu0 %v77
    %304 = vmatprep.subr.mxu0 0.0
    %305 = vmatpush1.msra.mxu0 %v76
    %306 = vmatprep.subr.mxu0 0.0
    %307 = vmatpush1.msra.mxu0 %v75
    %308 = vmatprep.subr.mxu0 0.0
    %309 = vmatpush1.msra.mxu0 %v74
    %310 = vmatprep.subr.mxu0 0.0
    %311 = vmatpush2.msra.mxu0 0.0
    %312 = vmatprep.subr.mxu0 0.0
    %313 = vmatpush2.msra.mxu0 0.0
    %314 = vmatprep.subr.mxu0 0.0
    %315 = vmatpush2.msra.mxu0 0.0
    %316 = vmatprep.subr.mxu0 0.0
    %317 = vmatpush2.msra.mxu0 0.0
    %318 = vmatprep.subr.mxu0 0.0
    %319 = vmatpush2.msra.mxu0 0.0
    %320 = vmatprep.subr.mxu0 0.0
    %321 = vmatpush2.msra.mxu0 0.0
    %322 = vmatprep.subr.mxu0 0.0
    %323 = vmatpush2.msra.mxu0 0.0
    %324 = vmatprep.subr.mxu0 0.0
    %325 = vmatpush2.msra.mxu0 0.0
    %326 = vmatprep.subr.mxu0 0.0
    %327 = vmatpush2.msra.mxu0 0.0
    %328 = vmatprep.subr.mxu0 0.0
    %329 = vmatpush2.msra.mxu0 0.0
    %330 = vmatprep.subr.mxu0 0.0
    %331 = vmatpush2.msra.mxu0 0.0
    %332 = vmatprep.subr.mxu0 0.0
    %333 = vmatpush2.msra.mxu0 0.0
    %334 = vmatprep.subr.mxu0 0.0
    %335 = vmatpush2.msra.mxu0 0.0
    %336 = vmatprep.subr.mxu0 0.0
    %337 = vmatpush2.msra.mxu0 0.0
    %338 = vmatprep.subr.mxu0 0.0
    %339 = vmatpush2.msra.mxu0 0.0
    %340 = vmatprep.subr.mxu0 0.0
    %341 = vmatpush2.msra.mxu0 0.0
    %342 = vmatprep.mubr.f32.mxu0 0.0
    %343 = vmatmul.mubr.f32.gmra.mxu0 %v267
    %v344 = vpop.f32.mrf.mxu0
    %v345 = vadd.f32 0.0, %v344
    %v346 = vpop.f32.mrf.mxu0
    %347 = vmatprep.mubr.f32.mxu0 0.0
    %348 = vmatmul.mubr.f32.gmra.mxu0 %v270
    %v349 = vpop.f32.mrf.mxu0
    %v350 = vadd.f32 0.0, %v349
    %v351 = vpop.f32.mrf.mxu0
    %352 = vmatprep.mubr.f32.mxu0 0.0
    %353 = vmatmul.mubr.f32.gmra.mxu0 %v273
    %v354 = vpop.f32.mrf.mxu0
    %v355 = vadd.f32 0.0, %v354
    %v356 = vpop.f32.mrf.mxu0
    %357 = vmatprep.mubr.f32.mxu0 0.0
    %358 = vmatmul.mubr.f32.gmra.mxu0 %v276
    %v359 = vpop.f32.mrf.mxu0
    %v360 = vadd.f32 0.0, %v359
    %v361 = vpop.f32.mrf.mxu0
    %362 = vdwg.mxu0
    %v363 = vxor.u32 %v345, 2147483648
    %v364 = vxor.u32 %v350, 2147483648
    %v365 = vxor.u32 %v355, 2147483648
    %v366 = vxor.u32 %v360, 2147483648
    %v367 = vmul.f32 %v363, 1.442695
    %v368 = vpow.pop %v367
    %v369 = vmul.f32 %v364, 1.442695
    %v370 = vpow.pop %v369
    %v371 = vmul.f32 %v365, 1.442695
    %v372 = vpow.pop %v371
    %v373 = vmul.f32 %v366, 1.442695
    %v374 = vpow.pop %v373
    %v375 = vadd.f32 %v368, 1.0
    %v376 = vadd.f32 %v370, 1.0
    %v377 = vadd.f32 %v372, 1.0
    %v378 = vadd.f32 %v374, 1.0
    %v379 = vrcp.pop %v375
    %v380 = vmul.f32 1.0, %v379
    %v381 = vrcp.pop %v376
    %v382 = vmul.f32 1.0, %v381
    %v383 = vrcp.pop %v377
    %v384 = vmul.f32 1.0, %v383
    %v385 = vrcp.pop %v378
    %v386 = vmul.f32 1.0, %v385
    %v387 = vadd.f32 %v380, 1e-08
    %v388 = vadd.f32 %v382, 1e-08
    %v389 = vadd.f32 %v384, 1e-08
    %v390 = vadd.f32 %v386, 1e-08
    %vm391 = vcmask 64512
    %v392 = vsel %vm391, %v387, 0.0
    %393 = vadd.xlane.f32.xlu0 %v392
    %v394 = vpop.xlane.xlu0 %393
    %v395 = vsel %vm391, %v388, 0.0
    %396 = vadd.xlane.f32.xlu0 %v395
    %v397 = vpop.xlane.xlu0 %396
    %v398 = vsel %vm391, %v389, 0.0
    %399 = vadd.xlane.f32.xlu0 %v398
    %v400 = vpop.xlane.xlu0 %399
    %v401 = vsel %vm391, %v390, 0.0
    %402 = vadd.xlane.f32.xlu0 %v401
    %v403 = vpop.xlane.xlu0 %402
    %v404 = vrcp.pop %v394
    %v405 = vrcp.pop %v397
    %v406 = vrcp.pop %v400
    %v407 = vrcp.pop %v403
    %v408 = vmul.f32 %v387, %v404
    %v409 = vmul.f32 %v388, %v405
    %v410 = vmul.f32 %v389, %v406
    %v411 = vmul.f32 %v390, %v407
    %412 = vxpose.xlu0.b32.start [1/16] %v408, 128
    %413 = vxpose.xlu0.b32.cont [2/16] %v409, 128
    %414 = vxpose.xlu0.b32.cont [3/16] 0.0, 128
    %415 = vxpose.xlu0.b32.cont [4/16] 0.0, 128
    %416 = vxpose.xlu0.b32.cont [5/16] 0.0, 128
    %417 = vxpose.xlu0.b32.cont [6/16] 0.0, 128
    %418 = vxpose.xlu0.b32.cont [7/16] 0.0, 128
    %419 = vxpose.xlu0.b32.cont [8/16] 0.0, 128
    %420 = vxpose.xlu0.b32.cont [9/16] 0.0, 128
    %421 = vxpose.xlu0.b32.cont [10/16] 0.0, 128
    %422 = vxpose.xlu0.b32.cont [11/16] 0.0, 128
    %423 = vxpose.xlu0.b32.cont [12/16] 0.0, 128
    %424 = vxpose.xlu0.b32.cont [13/16] 0.0, 128
    %425 = vxpose.xlu0.b32.cont [14/16] 0.0, 128
    %426 = vxpose.xlu0.b32.cont [15/16] 0.0, 128
    %427 = vxpose.xlu0.b32.end [16/16] 0.0, 128
    %v428 = vpop.trf.xlu0
    %v429 = vpop.trf.xlu0
    %v430 = vpop.trf.xlu0
    %v431 = vpop.trf.xlu0
    %v432 = vpop.trf.xlu0
    %v433 = vpop.trf.xlu0
    %v434 = vpop.trf.xlu0
    %v435 = vpop.trf.xlu0
    %v436 = vpop.trf.xlu0
    %v437 = vpop.trf.xlu0
    %v438 = vpop.trf.xlu0
    %v439 = vpop.trf.xlu0
    %v440 = vpop.trf.xlu0
    %v441 = vpop.trf.xlu0
    %v442 = vpop.trf.xlu0
    %v443 = vpop.trf.xlu0
    %v445 = vsel %vm80, %v428, 0
    %447 = vmatprep.subr.mxu0 0.0
    %448 = vmatpush1.msra.mxu0 0.0
    %449 = vmatprep.subr.mxu0 0.0
    %450 = vmatpush1.msra.mxu0 0.0
    %451 = vmatprep.subr.mxu0 0.0
    %452 = vmatpush1.msra.mxu0 0.0
    %453 = vmatprep.subr.mxu0 0.0
    %454 = vmatpush1.msra.mxu0 0.0
    %455 = vmatprep.subr.mxu0 0.0
    %456 = vmatpush1.msra.mxu0 0.0
    %457 = vmatprep.subr.mxu0 0.0
    %458 = vmatpush1.msra.mxu0 0.0
    %459 = vmatprep.subr.mxu0 0.0
    %460 = vmatpush1.msra.mxu0 0.0
    %461 = vmatprep.subr.mxu0 0.0
    %462 = vmatpush1.msra.mxu0 0.0
    %463 = vmatprep.subr.mxu0 0.0
    %464 = vmatpush1.msra.mxu0 0.0
    %465 = vmatprep.subr.mxu0 0.0
    %466 = vmatpush1.msra.mxu0 0.0
    %467 = vmatprep.subr.mxu0 0.0
    %468 = vmatpush1.msra.mxu0 0.0
    %469 = vmatprep.subr.mxu0 0.0
    %470 = vmatpush1.msra.mxu0 0.0
    %471 = vmatprep.subr.mxu0 0.0
    %472 = vmatpush1.msra.mxu0 0.0
    %473 = vmatprep.subr.mxu0 0.0
    %474 = vmatpush1.msra.mxu0 0.0
    %475 = vmatprep.subr.mxu0 0.0
    %476 = vmatpush1.msra.mxu0 %v252
    %477 = vmatprep.subr.mxu0 0.0
    %478 = vmatpush1.msra.mxu0 %v247
    %479 = vmatprep.subr.mxu0 0.0
    %480 = vmatpush2.msra.mxu0 0.0
    %481 = vmatprep.subr.mxu0 0.0
    %482 = vmatpush2.msra.mxu0 0.0
    %483 = vmatprep.subr.mxu0 0.0
    %484 = vmatpush2.msra.mxu0 0.0
    %485 = vmatprep.subr.mxu0 0.0
    %486 = vmatpush2.msra.mxu0 0.0
    %487 = vmatprep.subr.mxu0 0.0
    %488 = vmatpush2.msra.mxu0 0.0
    %489 = vmatprep.subr.mxu0 0.0
    %490 = vmatpush2.msra.mxu0 0.0
    %491 = vmatprep.subr.mxu0 0.0
    %492 = vmatpush2.msra.mxu0 0.0
    %493 = vmatprep.subr.mxu0 0.0
    %494 = vmatpush2.msra.mxu0 0.0
    %495 = vmatprep.subr.mxu0 0.0
    %496 = vmatpush2.msra.mxu0 0.0
    %497 = vmatprep.subr.mxu0 0.0
    %498 = vmatpush2.msra.mxu0 0.0
    %499 = vmatprep.subr.mxu0 0.0
    %500 = vmatpush2.msra.mxu0 0.0
    %501 = vmatprep.subr.mxu0 0.0
    %502 = vmatpush2.msra.mxu0 0.0
    %503 = vmatprep.subr.mxu0 0.0
    %504 = vmatpush2.msra.mxu0 0.0
    %505 = vmatprep.subr.mxu0 0.0
    %506 = vmatpush2.msra.mxu0 0.0
    %507 = vmatprep.subr.mxu0 0.0
    %508 = vmatpush2.msra.mxu0 0.0
    %509 = vmatprep.subr.mxu0 0.0
    %510 = vmatpush2.msra.mxu0 0.0
    %511 = vmatprep.mubr.f32.mxu0 0.0
    %512 = vmatmul.mubr.f32.gmra.mxu0 %v445
    %v513 = vpop.f32.mrf.mxu0
    %v514 = vadd.f32 0.0, %v513
    %v515 = vpop.f32.mrf.mxu0
    %516 = vdwg.mxu0
    %517 = vxpose.xlu0.b32.start [1/16] %v410, 128
    %518 = vxpose.xlu0.b32.cont [2/16] %v411, 128
    %519 = vxpose.xlu0.b32.cont [3/16] 0.0, 128
    %520 = vxpose.xlu0.b32.cont [4/16] 0.0, 128
    %521 = vxpose.xlu0.b32.cont [5/16] 0.0, 128
    %522 = vxpose.xlu0.b32.cont [6/16] 0.0, 128
    %523 = vxpose.xlu0.b32.cont [7/16] 0.0, 128
    %524 = vxpose.xlu0.b32.cont [8/16] 0.0, 128
    %525 = vxpose.xlu0.b32.cont [9/16] 0.0, 128
    %526 = vxpose.xlu0.b32.cont [10/16] 0.0, 128
    %527 = vxpose.xlu0.b32.cont [11/16] 0.0, 128
    %528 = vxpose.xlu0.b32.cont [12/16] 0.0, 128
    %529 = vxpose.xlu0.b32.cont [13/16] 0.0, 128
    %530 = vxpose.xlu0.b32.cont [14/16] 0.0, 128
    %531 = vxpose.xlu0.b32.cont [15/16] 0.0, 128
    %532 = vxpose.xlu0.b32.end [16/16] 0.0, 128
    %v533 = vpop.trf.xlu0
    %v534 = vpop.trf.xlu0
    %v535 = vpop.trf.xlu0
    %v536 = vpop.trf.xlu0
    %v537 = vpop.trf.xlu0
    %v538 = vpop.trf.xlu0
    %v539 = vpop.trf.xlu0
    %v540 = vpop.trf.xlu0
    %v541 = vpop.trf.xlu0
    %v542 = vpop.trf.xlu0
    %v543 = vpop.trf.xlu0
    %v544 = vpop.trf.xlu0
    %v545 = vpop.trf.xlu0
    %v546 = vpop.trf.xlu0
    %v547 = vpop.trf.xlu0
    %v548 = vpop.trf.xlu0
    %v550 = vsel %vm80, %v533, 0
    %552 = vmatprep.subr.mxu0 0.0
    %553 = vmatpush1.msra.mxu0 0.0
    %554 = vmatprep.subr.mxu0 0.0
    %555 = vmatpush1.msra.mxu0 0.0
    %556 = vmatprep.subr.mxu0 0.0
    %557 = vmatpush1.msra.mxu0 0.0
    %558 = vmatprep.subr.mxu0 0.0
    %559 = vmatpush1.msra.mxu0 0.0
    %560 = vmatprep.subr.mxu0 0.0
    %561 = vmatpush1.msra.mxu0 0.0
    %562 = vmatprep.subr.mxu0 0.0
    %563 = vmatpush1.msra.mxu0 0.0
    %564 = vmatprep.subr.mxu0 0.0
    %565 = vmatpush1.msra.mxu0 0.0
    %566 = vmatprep.subr.mxu0 0.0
    %567 = vmatpush1.msra.mxu0 0.0
    %568 = vmatprep.subr.mxu0 0.0
    %569 = vmatpush1.msra.mxu0 0.0
    %570 = vmatprep.subr.mxu0 0.0
    %571 = vmatpush1.msra.mxu0 0.0
    %572 = vmatprep.subr.mxu0 0.0
    %573 = vmatpush1.msra.mxu0 0.0
    %574 = vmatprep.subr.mxu0 0.0
    %575 = vmatpush1.msra.mxu0 0.0
    %576 = vmatprep.subr.mxu0 0.0
    %577 = vmatpush1.msra.mxu0 0.0
    %578 = vmatprep.subr.mxu0 0.0
    %579 = vmatpush1.msra.mxu0 0.0
    %580 = vmatprep.subr.mxu0 0.0
    %581 = vmatpush1.msra.mxu0 %v262
    %582 = vmatprep.subr.mxu0 0.0
    %583 = vmatpush1.msra.mxu0 %v257
    %584 = vmatprep.subr.mxu0 0.0
    %585 = vmatpush2.msra.mxu0 0.0
    %586 = vmatprep.subr.mxu0 0.0
    %587 = vmatpush2.msra.mxu0 0.0
    %588 = vmatprep.subr.mxu0 0.0
    %589 = vmatpush2.msra.mxu0 0.0
    %590 = vmatprep.subr.mxu0 0.0
    %591 = vmatpush2.msra.mxu0 0.0
    %592 = vmatprep.subr.mxu0 0.0
    %593 = vmatpush2.msra.mxu0 0.0
    %594 = vmatprep.subr.mxu0 0.0
    %595 = vmatpush2.msra.mxu0 0.0
    %596 = vmatprep.subr.mxu0 0.0
    %597 = vmatpush2.msra.mxu0 0.0
    %598 = vmatprep.subr.mxu0 0.0
    %599 = vmatpush2.msra.mxu0 0.0
    %600 = vmatprep.subr.mxu0 0.0
    %601 = vmatpush2.msra.mxu0 0.0
    %602 = vmatprep.subr.mxu0 0.0
    %603 = vmatpush2.msra.mxu0 0.0
    %604 = vmatprep.subr.mxu0 0.0
    %605 = vmatpush2.msra.mxu0 0.0
    %606 = vmatprep.subr.mxu0 0.0
    %607 = vmatpush2.msra.mxu0 0.0
    %608 = vmatprep.subr.mxu0 0.0
    %609 = vmatpush2.msra.mxu0 0.0
    %610 = vmatprep.subr.mxu0 0.0
    %611 = vmatpush2.msra.mxu0 0.0
    %612 = vmatprep.subr.mxu0 0.0
    %613 = vmatpush2.msra.mxu0 0.0
    %614 = vmatprep.subr.mxu0 0.0
    %615 = vmatpush2.msra.mxu0 0.0
    %616 = vmatprep.mubr.f32.mxu0 0.0
    %617 = vmatmul.mubr.f32.gmra.mxu0 %v550
    %v618 = vpop.f32.mrf.mxu0
    %v619 = vadd.f32 0.0, %v618
    %v620 = vpop.f32.mrf.mxu0
    %621 = vdwg.mxu0
    %v622 = vadd.f32 %v68, %v514
    %v623 = vadd.f32 %v69, %v619
    %624 = vst.msk [vmem:[#allocation2] sm:$0xff] %vm265, %v622
    %625 = vst.msk [vmem:[#allocation2 + $0x8] sm:$0xff] %vm265, %v623
    // Predicated region
    $region50: #{tpu_custom_call.1} parent=1 // pred_check
      %p626 = pneg %p61
    $region51: #{tpu_custom_call.1} parent=1 // pred_check_branch
      %628 = sbr.rel (%p626) target = $region53
    $region52: #{tpu_custom_call.1} parent=1 // pred_region
      %v629 = vld [vmem:[#allocation2] sm:$0xff]
      %v630 = vld [vmem:[#allocation2 + $0x8] sm:$0xff]
      %v631 = vld [vmem:[%s4] sm:$0xff]
      %v632 = vld [vmem:[%s4 + $0x8] sm:$0xff]
      %v633 = vld [vmem:[%s4 + $0x10] sm:$0xff]
      %v634 = vld [vmem:[%s4 + $0x18] sm:$0xff]
      %v635 = vld [vmem:[%s5] sm:$0xff]
      %v636 = vld [vmem:[%s5 + $0x8] sm:$0xff]
      %v637 = vld [vmem:[%s5 + $0x10] sm:$0xff]
      %v638 = vld [vmem:[%s5 + $0x18] sm:$0xff]
      %v640 = vsel %vm265, %v629, 0
      %v643 = vsel %vm265, %v630, 0
      %645 = vmatprep.subr.mxu0 0.0
      %646 = vmatpush1.msra.mxu0 0.0
      %647 = vmatprep.subr.mxu0 0.0
      %648 = vmatpush1.msra.mxu0 0.0
      %649 = vmatprep.subr.mxu0 0.0
      %650 = vmatpush1.msra.mxu0 0.0
      %651 = vmatprep.subr.mxu0 0.0
      %652 = vmatpush1.msra.mxu0 0.0
      %653 = vmatprep.subr.mxu0 0.0
      %654 = vmatpush1.msra.mxu0 0.0
      %655 = vmatprep.subr.mxu0 0.0
      %656 = vmatpush1.msra.mxu0 0.0
      %657 = vmatprep.subr.mxu0 0.0
      %658 = vmatpush1.msra.mxu0 0.0
      %659 = vmatprep.subr.mxu0 0.0
      %660 = vmatpush1.msra.mxu0 0.0
      %661 = vmatprep.subr.mxu0 0.0
      %662 = vmatpush1.msra.mxu0 0.0
      %663 = vmatprep.subr.mxu0 0.0
      %664 = vmatpush1.msra.mxu0 0.0
      %665 = vmatprep.subr.mxu0 0.0
      %666 = vmatpush1.msra.mxu0 0.0
      %667 = vmatprep.subr.mxu0 0.0
      %668 = vmatpush1.msra.mxu0 0.0
      %669 = vmatprep.subr.mxu0 0.0
      %670 = vmatpush1.msra.mxu0 %v638
      %671 = vmatprep.subr.mxu0 0.0
      %672 = vmatpush1.msra.mxu0 %v637
      %673 = vmatprep.subr.mxu0 0.0
      %674 = vmatpush1.msra.mxu0 %v636
      %675 = vmatprep.subr.mxu0 0.0
      %676 = vmatpush1.msra.mxu0 %v635
      %677 = vmatprep.subr.mxu0 0.0
      %678 = vmatpush2.msra.mxu0 0.0
      %679 = vmatprep.subr.mxu0 0.0
      %680 = vmatpush2.msra.mxu0 0.0
      %681 = vmatprep.subr.mxu0 0.0
      %682 = vmatpush2.msra.mxu0 0.0
      %683 = vmatprep.subr.mxu0 0.0
      %684 = vmatpush2.msra.mxu0 0.0
      %685 = vmatprep.subr.mxu0 0.0
      %686 = vmatpush2.msra.mxu0 0.0
      %687 = vmatprep.subr.mxu0 0.0
      %688 = vmatpush2.msra.mxu0 0.0
      %689 = vmatprep.subr.mxu0 0.0
      %690 = vmatpush2.msra.mxu0 0.0
      %691 = vmatprep.subr.mxu0 0.0
      %692 = vmatpush2.msra.mxu0 0.0
      %693 = vmatprep.subr.mxu0 0.0
      %694 = vmatpush2.msra.mxu0 0.0
      %695 = vmatprep.subr.mxu0 0.0
      %696 = vmatpush2.msra.mxu0 0.0
      %697 = vmatprep.subr.mxu0 0.0
      %698 = vmatpush2.msra.mxu0 0.0
      %699 = vmatprep.subr.mxu0 0.0
      %700 = vmatpush2.msra.mxu0 0.0
      %701 = vmatprep.subr.mxu0 0.0
      %702 = vmatpush2.msra.mxu0 0.0
      %703 = vmatprep.subr.mxu0 0.0
      %704 = vmatpush2.msra.mxu0 0.0
      %705 = vmatprep.subr.mxu0 0.0
      %706 = vmatpush2.msra.mxu0 0.0
      %707 = vmatprep.subr.mxu0 0.0
      %708 = vmatpush2.msra.mxu0 0.0
      %709 = vmatprep.mubr.f32.mxu0 0.0
      %710 = vmatmul.mubr.f32.gmra.mxu0 %v640
      %v711 = vpop.f32.mrf.mxu0
      %v712 = vadd.f32 0.0, %v711
      %v713 = vpop.f32.mrf.mxu0
      %714 = vmatprep.mubr.f32.mxu0 0.0
      %715 = vmatmul.mubr.f32.gmra.mxu0 %v643
      %v716 = vpop.f32.mrf.mxu0
      %v717 = vadd.f32 0.0, %v716
      %v718 = vpop.f32.mrf.mxu0
      %719 = vdwg.mxu0
      %v720 = vld [vmem:[#allocation6] sm:$0xff]
      %v721 = vld [vmem:[#allocation6 + $0x8] sm:$0xff]
      %v722 = vld [vmem:[#allocation6 + $0x10] sm:$0xff]
      %v723 = vld [vmem:[#allocation6 + $0x18] sm:$0xff]
      %724 = vmatprep.subr.mxu0 0.0
      %725 = vmatpush1.msra.mxu0 0.0
      %726 = vmatprep.subr.mxu0 0.0
      %727 = vmatpush1.msra.mxu0 0.0
      %728 = vmatprep.subr.mxu0 0.0
      %729 = vmatpush1.msra.mxu0 0.0
      %730 = vmatprep.subr.mxu0 0.0
      %731 = vmatpush1.msra.mxu0 0.0
      %732 = vmatprep.subr.mxu0 0.0
      %733 = vmatpush1.msra.mxu0 0.0
      %734 = vmatprep.subr.mxu0 0.0
      %735 = vmatpush1.msra.mxu0 0.0
      %736 = vmatprep.subr.mxu0 0.0
      %737 = vmatpush1.msra.mxu0 0.0
      %738 = vmatprep.subr.mxu0 0.0
      %739 = vmatpush1.msra.mxu0 0.0
      %740 = vmatprep.subr.mxu0 0.0
      %741 = vmatpush1.msra.mxu0 0.0
      %742 = vmatprep.subr.mxu0 0.0
      %743 = vmatpush1.msra.mxu0 0.0
      %744 = vmatprep.subr.mxu0 0.0
      %745 = vmatpush1.msra.mxu0 0.0
      %746 = vmatprep.subr.mxu0 0.0
      %747 = vmatpush1.msra.mxu0 0.0
      %748 = vmatprep.subr.mxu0 0.0
      %749 = vmatpush1.msra.mxu0 %v723
      %750 = vmatprep.subr.mxu0 0.0
      %751 = vmatpush1.msra.mxu0 %v722
      %752 = vmatprep.subr.mxu0 0.0
      %753 = vmatpush1.msra.mxu0 %v721
      %754 = vmatprep.subr.mxu0 0.0
      %755 = vmatpush1.msra.mxu0 %v720
      %756 = vmatprep.subr.mxu0 0.0
      %757 = vmatpush2.msra.mxu0 0.0
      %758 = vmatprep.subr.mxu0 0.0
      %759 = vmatpush2.msra.mxu0 0.0
      %760 = vmatprep.subr.mxu0 0.0
      %761 = vmatpush2.msra.mxu0 0.0
      %762 = vmatprep.subr.mxu0 0.0
      %763 = vmatpush2.msra.mxu0 0.0
      %764 = vmatprep.subr.mxu0 0.0
      %765 = vmatpush2.msra.mxu0 0.0
      %766 = vmatprep.subr.mxu0 0.0
      %767 = vmatpush2.msra.mxu0 0.0
      %768 = vmatprep.subr.mxu0 0.0
      %769 = vmatpush2.msra.mxu0 0.0
      %770 = vmatprep.subr.mxu0 0.0
      %771 = vmatpush2.msra.mxu0 0.0
      %772 = vmatprep.subr.mxu0 0.0
      %773 = vmatpush2.msra.mxu0 0.0
      %774 = vmatprep.subr.mxu0 0.0
      %775 = vmatpush2.msra.mxu0 0.0
      %776 = vmatprep.subr.mxu0 0.0
      %777 = vmatpush2.msra.mxu0 0.0
      %778 = vmatprep.subr.mxu0 0.0
      %779 = vmatpush2.msra.mxu0 0.0
      %780 = vmatprep.subr.mxu0 0.0
      %781 = vmatpush2.msra.mxu0 0.0
      %782 = vmatprep.subr.mxu0 0.0
      %783 = vmatpush2.msra.mxu0 0.0
      %784 = vmatprep.subr.mxu0 0.0
      %785 = vmatpush2.msra.mxu0 0.0
      %786 = vmatprep.subr.mxu0 0.0
      %787 = vmatpush2.msra.mxu0 0.0
      %788 = vmatprep.mubr.f32.mxu0 0.0
      %789 = vmatmul.mubr.f32.gmra.mxu0 %v640
      %v790 = vpop.f32.mrf.mxu0
      %v791 = vadd.f32 0.0, %v790
      %v792 = vpop.f32.mrf.mxu0
      %793 = vmatprep.mubr.f32.mxu0 0.0
      %794 = vmatmul.mubr.f32.gmra.mxu0 %v643
      %v795 = vpop.f32.mrf.mxu0
      %v796 = vadd.f32 0.0, %v795
      %v797 = vpop.f32.mrf.mxu0
      %798 = vdwg.mxu0
      %v800 = vsel %vm265, %v712, 0
      %v803 = vsel %vm265, %v717, 0
      %805 = vmatprep.subr.mxu0 0.0
      %806 = vmatpush1.msra.mxu0 0.0
      %807 = vmatprep.subr.mxu0 0.0
      %808 = vmatpush1.msra.mxu0 0.0
      %809 = vmatprep.subr.mxu0 0.0
      %810 = vmatpush1.msra.mxu0 0.0
      %811 = vmatprep.subr.mxu0 0.0
      %812 = vmatpush1.msra.mxu0 0.0
      %813 = vmatprep.subr.mxu0 0.0
      %814 = vmatpush1.msra.mxu0 0.0
      %815 = vmatprep.subr.mxu0 0.0
      %816 = vmatpush1.msra.mxu0 0.0
      %817 = vmatprep.subr.mxu0 0.0
      %818 = vmatpush1.msra.mxu0 0.0
      %819 = vmatprep.subr.mxu0 0.0
      %820 = vmatpush1.msra.mxu0 0.0
      %821 = vmatprep.subr.mxu0 0.0
      %822 = vmatpush1.msra.mxu0 0.0
      %823 = vmatprep.subr.mxu0 0.0
      %824 = vmatpush1.msra.mxu0 0.0
      %825 = vmatprep.subr.mxu0 0.0
      %826 = vmatpush1.msra.mxu0 0.0
      %827 = vmatprep.subr.mxu0 0.0
      %828 = vmatpush1.msra.mxu0 0.0
      %829 = vmatprep.subr.mxu0 0.0
      %830 = vmatpush1.msra.mxu0 %v634
      %831 = vmatprep.subr.mxu0 0.0
      %832 = vmatpush1.msra.mxu0 %v633
      %833 = vmatprep.subr.mxu0 0.0
      %834 = vmatpush1.msra.mxu0 %v632
      %835 = vmatprep.subr.mxu0 0.0
      %836 = vmatpush1.msra.mxu0 %v631
      %837 = vmatprep.subr.mxu0 0.0
      %838 = vmatpush2.msra.mxu0 0.0
      %839 = vmatprep.subr.mxu0 0.0
      %840 = vmatpush2.msra.mxu0 0.0
      %841 = vmatprep.subr.mxu0 0.0
      %842 = vmatpush2.msra.mxu0 0.0
      %843 = vmatprep.subr.mxu0 0.0
      %844 = vmatpush2.msra.mxu0 0.0
      %845 = vmatprep.subr.mxu0 0.0
      %846 = vmatpush2.msra.mxu0 0.0
      %847 = vmatprep.subr.mxu0 0.0
      %848 = vmatpush2.msra.mxu0 0.0
      %849 = vmatprep.subr.mxu0 0.0
      %850 = vmatpush2.msra.mxu0 0.0
      %851 = vmatprep.subr.mxu0 0.0
      %852 = vmatpush2.msra.mxu0 0.0
      %853 = vmatprep.subr.mxu0 0.0
      %854 = vmatpush2.msra.mxu0 0.0
      %855 = vmatprep.subr.mxu0 0.0
      %856 = vmatpush2.msra.mxu0 0.0
      %857 = vmatprep.subr.mxu0 0.0
      %858 = vmatpush2.msra.mxu0 0.0
      %859 = vmatprep.subr.mxu0 0.0
      %860 = vmatpush2.msra.mxu0 0.0
      %861 = vmatprep.subr.mxu0 0.0
      %862 = vmatpush2.msra.mxu0 0.0
      %863 = vmatprep.subr.mxu0 0.0
      %864 = vmatpush2.msra.mxu0 0.0
      %865 = vmatprep.subr.mxu0 0.0
      %866 = vmatpush2.msra.mxu0 0.0
      %867 = vmatprep.subr.mxu0 0.0
      %868 = vmatpush2.msra.mxu0 0.0
      %869 = vmatprep.mubr.f32.mxu0 0.0
      %870 = vmatmul.mubr.f32.gmra.mxu0 %v800
      %v871 = vpop.f32.mrf.mxu0
      %v872 = vadd.f32 0.0, %v871
      %v873 = vpop.f32.mrf.mxu0
      %874 = vmatprep.mubr.f32.mxu0 0.0
      %875 = vmatmul.mubr.f32.gmra.mxu0 %v803
      %v876 = vpop.f32.mrf.mxu0
      %v877 = vadd.f32 0.0, %v876
      %v878 = vpop.f32.mrf.mxu0
      %879 = vdwg.mxu0
      %v880 = vxor.u32 %v872, 2147483648
      %v881 = vxor.u32 %v877, 2147483648
      %v882 = vmul.f32 %v880, 1.442695
      %v883 = vpow.pop %v882
      %v884 = vmul.f32 %v881, 1.442695
      %v885 = vpow.pop %v884
      %v886 = vadd.f32 %v883, 1.0
      %v887 = vadd.f32 %v885, 1.0
      %v888 = vrcp.pop %v886
      %v889 = vmul.f32 1.0, %v888
      %v890 = vrcp.pop %v887
      %v891 = vmul.f32 1.0, %v890
      %v892 = vadd.f32 %v889, 1e-08
      %v893 = vadd.f32 %v891, 1e-08
      %vm894 = vcmask 31744
      %v895 = vsel %vm894, %v892, 0.0
      %896 = vadd.xlane.f32.xlu0 %v895
      %v897 = vpop.xlane.xlu0 %896
      %v898 = vsel %vm894, %v893, 0.0
      %899 = vadd.xlane.f32.xlu0 %v898
      %v900 = vpop.xlane.xlu0 %899
      %v901 = vrcp.pop %v897
      %v902 = vrcp.pop %v900
      %v903 = vmul.f32 %v892, %v901
      %v904 = vmul.f32 %v893, %v902
      %905 = vxpose.xlu0.b32.start [1/16] %v903, 128
      %906 = vxpose.xlu0.b32.cont [2/16] 0.0, 128
      %907 = vxpose.xlu0.b32.cont [3/16] 0.0, 128
      %908 = vxpose.xlu0.b32.cont [4/16] 0.0, 128
      %909 = vxpose.xlu0.b32.cont [5/16] 0.0, 128
      %910 = vxpose.xlu0.b32.cont [6/16] 0.0, 128
      %911 = vxpose.xlu0.b32.cont [7/16] 0.0, 128
      %912 = vxpose.xlu0.b32.cont [8/16] 0.0, 128
      %913 = vxpose.xlu0.b32.cont [9/16] 0.0, 128
      %914 = vxpose.xlu0.b32.cont [10/16] 0.0, 128
      %915 = vxpose.xlu0.b32.cont [11/16] 0.0, 128
      %916 = vxpose.xlu0.b32.cont [12/16] 0.0, 128
      %917 = vxpose.xlu0.b32.cont [13/16] 0.0, 128
      %918 = vxpose.xlu0.b32.cont [14/16] 0.0, 128
      %919 = vxpose.xlu0.b32.cont [15/16] 0.0, 128
      %920 = vxpose.xlu0.b32.end [16/16] 0.0, 128
      %v921 = vpop.trf.xlu0
      %v922 = vpop.trf.xlu0
      %v923 = vpop.trf.xlu0
      %v924 = vpop.trf.xlu0
      %v925 = vpop.trf.xlu0
      %v926 = vpop.trf.xlu0
      %v927 = vpop.trf.xlu0
      %v928 = vpop.trf.xlu0
      %v929 = vpop.trf.xlu0
      %v930 = vpop.trf.xlu0
      %v931 = vpop.trf.xlu0
      %v932 = vpop.trf.xlu0
      %v933 = vpop.trf.xlu0
      %v934 = vpop.trf.xlu0
      %v935 = vpop.trf.xlu0
      %v936 = vpop.trf.xlu0
      %v938 = vsel %vm391, %v921, 0
      %940 = vmatprep.subr.mxu0 0.0
      %941 = vmatpush1.msra.mxu0 0.0
      %942 = vmatprep.subr.mxu0 0.0
      %943 = vmatpush1.msra.mxu0 0.0
      %944 = vmatprep.subr.mxu0 0.0
      %945 = vmatpush1.msra.mxu0 0.0
      %946 = vmatprep.subr.mxu0 0.0
      %947 = vmatpush1.msra.mxu0 0.0
      %948 = vmatprep.subr.mxu0 0.0
      %949 = vmatpush1.msra.mxu0 0.0
      %950 = vmatprep.subr.mxu0 0.0
      %951 = vmatpush1.msra.mxu0 0.0
      %952 = vmatprep.subr.mxu0 0.0
      %953 = vmatpush1.msra.mxu0 0.0
      %954 = vmatprep.subr.mxu0 0.0
      %955 = vmatpush1.msra.mxu0 0.0
      %956 = vmatprep.subr.mxu0 0.0
      %957 = vmatpush1.msra.mxu0 0.0
      %958 = vmatprep.subr.mxu0 0.0
      %959 = vmatpush1.msra.mxu0 0.0
      %960 = vmatprep.subr.mxu0 0.0
      %961 = vmatpush1.msra.mxu0 0.0
      %962 = vmatprep.subr.mxu0 0.0
      %963 = vmatpush1.msra.mxu0 0.0
      %964 = vmatprep.subr.mxu0 0.0
      %965 = vmatpush1.msra.mxu0 0.0
      %966 = vmatprep.subr.mxu0 0.0
      %967 = vmatpush1.msra.mxu0 0.0
      %968 = vmatprep.subr.mxu0 0.0
      %969 = vmatpush1.msra.mxu0 0.0
      %970 = vmatprep.subr.mxu0 0.0
      %971 = vmatpush1.msra.mxu0 %v791
      %972 = vmatprep.subr.mxu0 0.0
      %973 = vmatpush2.msra.mxu0 0.0
      %974 = vmatprep.subr.mxu0 0.0
      %975 = vmatpush2.msra.mxu0 0.0
      %976 = vmatprep.subr.mxu0 0.0
      %977 = vmatpush2.msra.mxu0 0.0
      %978 = vmatprep.subr.mxu0 0.0
      %979 = vmatpush2.msra.mxu0 0.0
      %980 = vmatprep.subr.mxu0 0.0
      %981 = vmatpush2.msra.mxu0 0.0
      %982 = vmatprep.subr.mxu0 0.0
      %983 = vmatpush2.msra.mxu0 0.0
      %984 = vmatprep.subr.mxu0 0.0
      %985 = vmatpush2.msra.mxu0 0.0
      %986 = vmatprep.subr.mxu0 0.0
      %987 = vmatpush2.msra.mxu0 0.0
      %988 = vmatprep.subr.mxu0 0.0
      %989 = vmatpush2.msra.mxu0 0.0
      %990 = vmatprep.subr.mxu0 0.0
      %991 = vmatpush2.msra.mxu0 0.0
      %992 = vmatprep.subr.mxu0 0.0
      %993 = vmatpush2.msra.mxu0 0.0
      %994 = vmatprep.subr.mxu0 0.0
      %995 = vmatpush2.msra.mxu0 0.0
      %996 = vmatprep.subr.mxu0 0.0
      %997 = vmatpush2.msra.mxu0 0.0
      %998 = vmatprep.subr.mxu0 0.0
      %999 = vmatpush2.msra.mxu0 0.0
      %1000 = vmatprep.subr.mxu0 0.0
      %1001 = vmatpush2.msra.mxu0 0.0
      %1002 = vmatprep.subr.mxu0 0.0
      %1003 = vmatpush2.msra.mxu0 0.0
      %1004 = vmatprep.mubr.f32.mxu0 0.0
      %1005 = vmatmul.mubr.f32.gmra.mxu0 %v938
      %v1006 = vpop.f32.mrf.mxu0
      %v1007 = vadd.f32 0.0, %v1006
      %v1008 = vpop.f32.mrf.mxu0
      %1009 = vdwg.mxu0
      %1010 = vxpose.xlu0.b32.start [1/16] %v904, 128
      %1011 = vxpose.xlu0.b32.cont [2/16] 0.0, 128
      %1012 = vxpose.xlu0.b32.cont [3/16] 0.0, 128
      %1013 = vxpose.xlu0.b32.cont [4/16] 0.0, 128
      %1014 = vxpose.xlu0.b32.cont [5/16] 0.0, 128
      %1015 = vxpose.xlu0.b32.cont [6/16] 0.0, 128
      %1016 = vxpose.xlu0.b32.cont [7/16] 0.0, 128
      %1017 = vxpose.xlu0.b32.cont [8/16] 0.0, 128
      %1018 = vxpose.xlu0.b32.cont [9/16] 0.0, 128
      %1019 = vxpose.xlu0.b32.cont [10/16] 0.0, 128
      %1020 = vxpose.xlu0.b32.cont [11/16] 0.0, 128
      %1021 = vxpose.xlu0.b32.cont [12/16] 0.0, 128
      %1022 = vxpose.xlu0.b32.cont [13/16] 0.0, 128
      %1023 = vxpose.xlu0.b32.cont [14/16] 0.0, 128
      %1024 = vxpose.xlu0.b32.cont [15/16] 0.0, 128
      %1025 = vxpose.xlu0.b32.end [16/16] 0.0, 128
      %v1026 = vpop.trf.xlu0
      %v1027 = vpop.trf.xlu0
      %v1028 = vpop.trf.xlu0
      %v1029 = vpop.trf.xlu0
      %v1030 = vpop.trf.xlu0
      %v1031 = vpop.trf.xlu0
      %v1032 = vpop.trf.xlu0
      %v1033 = vpop.trf.xlu0
      %v1034 = vpop.trf.xlu0
      %v1035 = vpop.trf.xlu0
      %v1036 = vpop.trf.xlu0
      %v1037 = vpop.trf.xlu0
      %v1038 = vpop.trf.xlu0
      %v1039 = vpop.trf.xlu0
      %v1040 = vpop.trf.xlu0
      %v1041 = vpop.trf.xlu0
      %v1043 = vsel %vm391, %v1026, 0
      %1045 = vmatprep.subr.mxu0 0.0
      %1046 = vmatpush1.msra.mxu0 0.0
      %1047 = vmatprep.subr.mxu0 0.0
      %1048 = vmatpush1.msra.mxu0 0.0
      %1049 = vmatprep.subr.mxu0 0.0
      %1050 = vmatpush1.msra.mxu0 0.0
      %1051 = vmatprep.subr.mxu0 0.0
      %1052 = vmatpush1.msra.mxu0 0.0
      %1053 = vmatprep.subr.mxu0 0.0
      %1054 = vmatpush1.msra.mxu0 0.0
      %1055 = vmatprep.subr.mxu0 0.0
      %1056 = vmatpush1.msra.mxu0 0.0
      %1057 = vmatprep.subr.mxu0 0.0
      %1058 = vmatpush1.msra.mxu0 0.0
      %1059 = vmatprep.subr.mxu0 0.0
      %1060 = vmatpush1.msra.mxu0 0.0
      %1061 = vmatprep.subr.mxu0 0.0
      %1062 = vmatpush1.msra.mxu0 0.0
      %1063 = vmatprep.subr.mxu0 0.0
      %1064 = vmatpush1.msra.mxu0 0.0
      %1065 = vmatprep.subr.mxu0 0.0
      %1066 = vmatpush1.msra.mxu0 0.0
      %1067 = vmatprep.subr.mxu0 0.0
      %1068 = vmatpush1.msra.mxu0 0.0
      %1069 = vmatprep.subr.mxu0 0.0
      %1070 = vmatpush1.msra.mxu0 0.0
      %1071 = vmatprep.subr.mxu0 0.0
      %1072 = vmatpush1.msra.mxu0 0.0
      %1073 = vmatprep.subr.mxu0 0.0
      %1074 = vmatpush1.msra.mxu0 0.0
      %1075 = vmatprep.subr.mxu0 0.0
      %1076 = vmatpush1.msra.mxu0 %v796
      %1077 = vmatprep.subr.mxu0 0.0
      %1078 = vmatpush2.msra.mxu0 0.0
      %1079 = vmatprep.subr.mxu0 0.0
      %1080 = vmatpush2.msra.mxu0 0.0
      %1081 = vmatprep.subr.mxu0 0.0
      %1082 = vmatpush2.msra.mxu0 0.0
      %1083 = vmatprep.subr.mxu0 0.0
      %1084 = vmatpush2.msra.mxu0 0.0
      %1085 = vmatprep.subr.mxu0 0.0
      %1086 = vmatpush2.msra.mxu0 0.0
      %1087 = vmatprep.subr.mxu0 0.0
      %1088 = vmatpush2.msra.mxu0 0.0
      %1089 = vmatprep.subr.mxu0 0.0
      %1090 = vmatpush2.msra.mxu0 0.0
      %1091 = vmatprep.subr.mxu0 0.0
      %1092 = vmatpush2.msra.mxu0 0.0
      %1093 = vmatprep.subr.mxu0 0.0
      %1094 = vmatpush2.msra.mxu0 0.0
      %1095 = vmatprep.subr.mxu0 0.0
      %1096 = vmatpush2.msra.mxu0 0.0
      %1097 = vmatprep.subr.mxu0 0.0
      %1098 = vmatpush2.msra.mxu0 0.0
      %1099 = vmatprep.subr.mxu0 0.0
      %1100 = vmatpush2.msra.mxu0 0.0
      %1101 = vmatprep.subr.mxu0 0.0
      %1102 = vmatpush2.msra.mxu0 0.0
      %1103 = vmatprep.subr.mxu0 0.0
      %1104 = vmatpush2.msra.mxu0 0.0
      %1105 = vmatprep.subr.mxu0 0.0
      %1106 = vmatpush2.msra.mxu0 0.0
      %1107 = vmatprep.subr.mxu0 0.0
      %1108 = vmatpush2.msra.mxu0 0.0
      %1109 = vmatprep.mubr.f32.mxu0 0.0
      %1110 = vmatmul.mubr.f32.gmra.mxu0 %v1043
      %v1111 = vpop.f32.mrf.mxu0
      %v1112 = vadd.f32 0.0, %v1111
      %v1113 = vpop.f32.mrf.mxu0
      %1114 = vdwg.mxu0
      %vm1115 = vcmask 257024
      %v1116 = vsel %vm1115, %v1007, 0.0
      %v1117 = vrot.slane %v1116, 4
      %v1118 = vadd.f32 %v1116, %v1117
      %v1119 = vrot.slane %v1118, 2
      %v1120 = vadd.f32 %v1118, %v1119
      %v1121 = vrot.slane %v1120, 1
      %v1122 = vadd.f32 %v1120, %v1121
      %v1123 = vsel %vm1115, %v1112, 0.0
      %v1124 = vrot.slane %v1123, 4
      %v1125 = vadd.f32 %v1123, %v1124
      %v1126 = vrot.slane %v1125, 2
      %v1127 = vadd.f32 %v1125, %v1126
      %v1128 = vrot.slane %v1127, 1
      %v1129 = vadd.f32 %v1127, %v1128
      %vm1132 = vcmask 1041409
      %v1133 = vsel %vm1132, %v1129, %v1122
      %vm1135 = vcmask 254976
      %v1136 = vsel %vm1135, %v1133, 0.0
      %1137 = vadd.xlane.f32.xlu0 %v1136
      %v1138 = vpop.xlane.xlu0 %1137
      %v1139 = vrcp.pop 32.0
      %v1140 = vmul.f32 %v1138, %v1139
      %v1142 = vrot.slane %v1140, 1
      %v1145 = vsub.f32 %v1122, %v1140
      %v1146 = vsub.f32 %v1129, %v1142
      %v1147 = vmul.f32 %v1145, %v1145
      %v1148 = vmul.f32 %v1146, %v1146
      %v1151 = vrot.slane %v1148, 7
      %v1152 = vsel %vm1132, %v1151, %v1147
      %v1154 = vsel %vm1135, %v1152, 0.0
      %1155 = vadd.xlane.f32.xlu0 %v1154
      %v1156 = vpop.xlane.xlu0 %1155
      %v1157 = vmul.f32 %v1156, %v1139
      %v1158 = vadd.f32 %v1157, 1e-05
      %v1159 = vrsqrt.pop %v1158
      %v1161 = vrot.slane %v1159, 1
      %v1164 = vmul.f32 %v1145, %v1159
      %v1165 = vmul.f32 %v1146, %v1161
      %v1166 = vld [vmem:[%s7] sm:$0x1]
      %v1168 = vlaneseq
      %v1169 = vshrl.u32 %v1168, 7
      %v1170 = vsub.s32 0, %v1169
      %v1171 = vrot.slane %v1166, %v1170
      %v1173 = vmul.f32 %v1164, %v1171
      %v1174 = vmul.f32 %v1165, %v1171
      %v1175 = vld [vmem:[%s8] sm:$0x1]
      %v1177 = vlaneseq
      %v1178 = vshrl.u32 %v1177, 7
      %v1179 = vsub.s32 0, %v1178
      %v1180 = vrot.slane %v1175, %v1179
      %v1182 = vadd.f32 %v1173, %v1180
      %v1183 = vadd.f32 %v1174, %v1180
      %v1186 = vrot.slane %v1183, 7
      %v1187 = vsel %vm1132, %v1186, %v1182
      %1189 = vst.msk [vmem:[#allocation8] sm:$0x3] %vm1135, %v1187
    $region53: #{tpu_custom_call.1} parent=1 // pred_fallthru
      _
    // Predicated region
    $region54: #{tpu_custom_call.1} parent=1 // pred_check
      _
    $region55: #{tpu_custom_call.1} parent=1 // pred_check_branch
      %1191 = sbr.rel (0) target = $region57
    $region56: #{tpu_custom_call.1} parent=1 // pred_region
      %s1193 = ssub.s32 32, 32
      %1194 = vsyncadd [#allocation5], %s1193
      %s1196 = sshll.u32 [#allocation8], 4
      %s1197 = int_to_ptr.vmem [resolvable:$true] %s1196
      %1199 = dma.vmem_to_hbm [thread:$0]  %s1197, 32, %s9, [#allocation5]
    $region57: #{tpu_custom_call.1} parent=1 // pred_fallthru
      _
    // Predicated region
    $region58: #{tpu_custom_call.1} parent=1 // pred_check
      _
    $region59: #{tpu_custom_call.1} parent=1 // pred_check_branch
      %1201 = sbr.rel (0) target = $region61
    $region60: #{tpu_custom_call.1} parent=1 // pred_region
      %1202 = dma.done [#allocation5], 32
    $region61: #{tpu_custom_call.1} parent=1 // pred_fallthru
      _
    %1203 = vsyncpa [#allocation4], 1
    %1204 = vsyncpa [#allocation7], 1
    %1205 = vsyncpa [#allocation5], 1

</llo_original>
